<compile_context>
chip_gen: v7x
topology: tpu7x:2x2x1
jax: 0.10.0
libtpu: 0.0.40
codegen_flags: <defaults>
</compile_context>

<pallas_src>
import functools

import jax
import jax.numpy as jnp
from jax.experimental import pallas as pl
from jax.experimental.pallas import tpu as pltpu


def _round_up(n, m):
    return ((n + m - 1) // m) * m


def _encoder_kernel(x_ref, w1_ref, b1_ref, wh_ref, bh_ref, mu_ref, lv_ref, *,
                    latent_dim):
    # Hidden layer: Linear(784 -> H) + ReLU.  bf16 operands, f32 accumulate.
    h = jnp.dot(x_ref[...], w1_ref[...], preferred_element_type=jnp.float32)
    h = jnp.maximum(h + b1_ref[...], 0.0)

    # Fused heads: one (H, 2L) matmul instead of two small (H, L) matmuls.
    heads = jnp.dot(h.astype(wh_ref.dtype), wh_ref[...],
                    preferred_element_type=jnp.float32) + bh_ref[...]

    L = latent_dim
    mu = heads[:, :L]
    lv = heads[:, L:]

    # logvar = softmax(logvar, dim=-1) * latent_dim + 1e-6   (all f32)
    m = jnp.max(lv, axis=-1, keepdims=True)
    e = jnp.exp(lv - m)
    s = jnp.sum(e, axis=-1, keepdims=True)
    sm = e * pl.reciprocal(s, approx=True)
    lv_out = sm * jnp.float32(L) + jnp.float32(1e-6)

    mu_ref[...] = mu.astype(mu_ref.dtype)
    lv_ref[...] = lv_out.astype(lv_ref.dtype)


def mnist_cond_encoder(x, params, *, tb=128, compute_dtype=jnp.bfloat16):
    """x: (B, 1, 28, 28) float32. Returns (mu, logvar), each (B, latent_dim)."""
    B = x.shape[0]
    x_flat = x.reshape(B, -1).astype(jnp.float32)          # (B, 784)
    K = x_flat.shape[1]

    w1, b1 = params["w1"], params["b1"]
    wmu, bmu = params["wmu"], params["bmu"]
    wv, bv = params["wv"], params["bv"]
    H = w1.shape[1]
    L = wmu.shape[1]
    L2 = 2 * L

    # Pad contraction dim to a multiple of 128 and batch to a multiple of tb.
    K_pad = _round_up(K, 128)
    B_pad = _round_up(max(B, 1), tb)

    x_p = jnp.pad(x_flat, ((0, B_pad - B), (0, K_pad - K))).astype(compute_dtype)
    w1_p = jnp.pad(w1, ((0, K_pad - K), (0, 0))).astype(compute_dtype)
    b1_r = b1.reshape(1, H).astype(jnp.float32)

    # Fuse the mu / var heads into one weight & bias.
    wh = jnp.concatenate([wmu, wv], axis=1).astype(compute_dtype)     # (H, 2L)
    bh = jnp.concatenate([bmu, bv], axis=1).reshape(1, L2).astype(jnp.float32)

    grid = (B_pad // tb,)
    kernel = functools.partial(_encoder_kernel, latent_dim=L)

    mu, lv = pl.pallas_call(
        kernel,
        out_shape=(jax.ShapeDtypeStruct((B_pad, L), jnp.float32),
                   jax.ShapeDtypeStruct((B_pad, L), jnp.float32)),
        grid=grid,
        in_specs=[
            pl.BlockSpec((tb, K_pad), lambda i: (i, 0)),      # x: streamed
            pl.BlockSpec((K_pad, H), lambda i: (0, 0)),       # w1: resident
            pl.BlockSpec((1, H), lambda i: (0, 0)),           # b1: resident
            pl.BlockSpec((H, L2), lambda i: (0, 0)),          # fused head W
            pl.BlockSpec((1, L2), lambda i: (0, 0)),          # fused head b
        ],
        out_specs=(
            pl.BlockSpec((tb, L), lambda i: (i, 0)),
            pl.BlockSpec((tb, L), lambda i: (i, 0)),
        ),
        compiler_params=pltpu.CompilerParams(
            dimension_semantics=("parallel",)),
    )(x_p, w1_p, b1_r, wh, bh)

    return mu[:B], lv[:B]


def init_params(key, hidden_dim=128, latent_dim=16):
    """Deterministic init mirroring MNISTCondEncoder.__init__ (hidden_layers=1).
    Weights stored as (in, out)."""
    k1, k2, k3, k4, k5, k6 = jax.random.split(key, 6)

    def uni(k, shape, fan_in):
        bound = 1.0 / jnp.sqrt(jnp.float32(fan_in))
        return jax.random.uniform(k, shape, jnp.float32, -bound, bound)

    return {
        "w1": uni(k1, (784, hidden_dim), 784),
        "b1": uni(k2, (1, hidden_dim), 784),
        "wmu": uni(k3, (hidden_dim, latent_dim), hidden_dim),
        "bmu": uni(k4, (1, latent_dim), hidden_dim),
        "wv": uni(k5, (hidden_dim, latent_dim), hidden_dim),
        "bv": uni(k6, (1, latent_dim), hidden_dim),
    }


def _reference(x, params):
    """Pure-JAX f32 reference matching the PyTorch forward semantics."""
    B = x.shape[0]
    xf = x.reshape(B, -1)
    h = jnp.maximum(xf @ params["w1"] + params["b1"], 0.0)
    mu = h @ params["wmu"] + params["bmu"]
    lv = h @ params["wv"] + params["bv"]
    lv = jax.nn.softmax(lv, axis=-1) * lv.shape[-1] + 1e-6
    return mu, lv


if __name__ == "__main__":
    key = jax.random.PRNGKey(0)
    k_x, k_p = jax.random.split(key)

    B, hidden_dim, latent_dim = 2, 128, 16
    x = jax.random.normal(k_x, (B, 1, 28, 28), jnp.float32)
    params = init_params(k_p, hidden_dim=hidden_dim, latent_dim=latent_dim)

    mu, logvar = mnist_cond_encoder(x, params)
    jax.block_until_ready((mu, logvar))

    mu_ref, lv_ref = _reference(x, params)
    assert mu.shape == (B, latent_dim) and logvar.shape == (B, latent_dim)
    # bf16 matmul operands + approx reciprocal -> loosened tolerances.
    assert jnp.allclose(mu, mu_ref, atol=5e-2, rtol=5e-2)
    assert jnp.allclose(logvar, lv_ref, atol=5e-2, rtol=5e-2)

    print("KERNEL_OK")
</pallas_src>

<mosaic_0001>
module attributes {stable_mosaic.version = 11 : i64} {
  func.func @_encoder_kernel(%arg0: i32, %arg1: memref<128x896xbf16, #tpu.memory_space<vmem>>, %arg2: memref<896x128xbf16, #tpu.memory_space<vmem>>, %arg3: memref<1x128xf32, #tpu.memory_space<vmem>>, %arg4: memref<128x32xbf16, #tpu.memory_space<vmem>>, %arg5: memref<1x32xf32, #tpu.memory_space<vmem>>, %arg6: memref<128x16xf32, #tpu.memory_space<vmem>>, %arg7: memref<128x16xf32, #tpu.memory_space<vmem>>) attributes {dimension_semantics = [#tpu.dimension_semantics<parallel>], iteration_bounds = array<i64: 1>, scalar_prefetch = 0 : i64, scratch_operands = 0 : i64, tpu.core_type = #tpu.core_type<tc>, window_params = [{transform_indices = @transform_0, window_bounds = array<i64: 128, 896>}, {pipeline_mode = #tpu.pipeline_mode<synchronous>, transform_indices = @transform_1, window_bounds = array<i64: 896, 128>}, {pipeline_mode = #tpu.pipeline_mode<synchronous>, transform_indices = @transform_2, window_bounds = array<i64: 1, 128>}, {pipeline_mode = #tpu.pipeline_mode<synchronous>, transform_indices = @transform_3, window_bounds = array<i64: 128, 32>}, {pipeline_mode = #tpu.pipeline_mode<synchronous>, transform_indices = @transform_4, window_bounds = array<i64: 1, 32>}, {transform_indices = @transform_5, window_bounds = array<i64: 128, 16>}, {transform_indices = @transform_6, window_bounds = array<i64: 128, 16>}]} {
    %c0 = arith.constant 0 : index
    %c0_0 = arith.constant 0 : index
    %0 = vector.load %arg1[%c0, %c0_0] : memref<128x896xbf16, #tpu.memory_space<vmem>>, vector<128x896xbf16>
    %c0_1 = arith.constant 0 : index
    %c0_2 = arith.constant 0 : index
    %1 = vector.load %arg2[%c0_1, %c0_2] : memref<896x128xbf16, #tpu.memory_space<vmem>>, vector<896x128xbf16>
    %cst = arith.constant dense<0.000000e+00> : vector<128x128xf32>
    %2 = tpu.matmul %0, %1, %cst {dimension_numbers = #tpu.dot_dimension_numbers<[1], [0], [0], [1], [0, 0, 1, 1], [], []>} : vector<128x896xbf16>, vector<896x128xbf16>, vector<128x128xf32> -> vector<128x128xf32>
    %c0_3 = arith.constant 0 : index
    %c0_4 = arith.constant 0 : index
    %3 = vector.load %arg3[%c0_3, %c0_4] : memref<1x128xf32, #tpu.memory_space<vmem>>, vector<1x128xf32>
    %4 = vector.broadcast %3 : vector<1x128xf32> to vector<128x128xf32>
    %5 = arith.addf %2, %4 : vector<128x128xf32>
    %cst_5 = arith.constant 0.000000e+00 : f32
    %6 = vector.broadcast %cst_5 : f32 to vector<128x128xf32>
    %7 = arith.maximumf %5, %6 : vector<128x128xf32>
    %8 = arith.truncf %7 : vector<128x128xf32> to vector<128x128xbf16>
    %c0_6 = arith.constant 0 : index
    %c0_7 = arith.constant 0 : index
    %9 = vector.load %arg4[%c0_6, %c0_7] : memref<128x32xbf16, #tpu.memory_space<vmem>>, vector<128x32xbf16>
    %cst_8 = arith.constant dense<0.000000e+00> : vector<128x32xf32>
    %10 = tpu.matmul %8, %9, %cst_8 {dimension_numbers = #tpu.dot_dimension_numbers<[1], [0], [0], [1], [0, 0, 1, 1], [], []>} : vector<128x128xbf16>, vector<128x32xbf16>, vector<128x32xf32> -> vector<128x32xf32>
    %c0_9 = arith.constant 0 : index
    %c0_10 = arith.constant 0 : index
    %11 = vector.load %arg5[%c0_9, %c0_10] : memref<1x32xf32, #tpu.memory_space<vmem>>, vector<1x32xf32>
    %12 = vector.broadcast %11 : vector<1x32xf32> to vector<128x32xf32>
    %13 = arith.addf %10, %12 : vector<128x32xf32>
    %14 = vector.extract_strided_slice %13 {offsets = [0, 0], sizes = [128, 16], strides = [1, 1]} : vector<128x32xf32> to vector<128x16xf32>
    %15 = vector.extract_strided_slice %13 {offsets = [0, 16], sizes = [128, 16], strides = [1, 1]} : vector<128x32xf32> to vector<128x16xf32>
    %cst_11 = arith.constant dense<0xFF800000> : vector<128xf32>
    %16 = vector.multi_reduction <maximumf>, %15, %cst_11 [1] : vector<128x16xf32> to vector<128xf32>
    %17 = vector.shape_cast %16 : vector<128xf32> to vector<128x1xf32>
    %18 = vector.broadcast %17 : vector<128x1xf32> to vector<128x16xf32>
    %19 = arith.subf %15, %18 : vector<128x16xf32>
    %20 = math.exp %19 : vector<128x16xf32>
    %cst_12 = arith.constant dense<0.000000e+00> : vector<128xf32>
    %21 = vector.multi_reduction <add>, %20, %cst_12 [1] : vector<128x16xf32> to vector<128xf32>
    %22 = vector.shape_cast %21 : vector<128xf32> to vector<128x1xf32>
    %23 = tpu.reciprocal %22 {approx = true} : vector<128x1xf32> -> vector<128x1xf32>
    %24 = vector.broadcast %23 : vector<128x1xf32> to vector<128x16xf32>
    %25 = arith.mulf %20, %24 : vector<128x16xf32>
    %cst_13 = arith.constant 1.600000e+01 : f32
    %26 = vector.broadcast %cst_13 : f32 to vector<128x16xf32>
    %27 = arith.mulf %25, %26 : vector<128x16xf32>
    %cst_14 = arith.constant 9.99999997E-7 : f32
    %28 = vector.broadcast %cst_14 : f32 to vector<128x16xf32>
    %29 = arith.addf %27, %28 : vector<128x16xf32>
    %c0_15 = arith.constant 0 : index
    %c0_16 = arith.constant 0 : index
    %30 = vector.load %arg6[%c0_15, %c0_16] : memref<128x16xf32, #tpu.memory_space<vmem>>, vector<128x16xf32>
    tpu.vector_store %arg6[%c0_15, %c0_16], %14 {strides = array<i32>} : memref<128x16xf32, #tpu.memory_space<vmem>>, vector<128x16xf32>,
    %c0_17 = arith.constant 0 : index
    %c0_18 = arith.constant 0 : index
    %31 = vector.load %arg7[%c0_17, %c0_18] : memref<128x16xf32, #tpu.memory_space<vmem>>, vector<128x16xf32>
    tpu.vector_store %arg7[%c0_17, %c0_18], %29 {strides = array<i32>} : memref<128x16xf32, #tpu.memory_space<vmem>>, vector<128x16xf32>,
    return
  }
  func.func @transform_0(%arg0: i32) -> (i32, i32) {
    %c0_i32 = arith.constant 0 : i32
    %c0_i32_0 = arith.constant 0 : i32
    return %arg0, %c0_i32 : i32, i32
  }
  func.func @transform_1(%arg0: i32) -> (i32, i32) {
    %c0_i32 = arith.constant 0 : i32
    %c0_i32_0 = arith.constant 0 : i32
    %c0_i32_1 = arith.constant 0 : i32
    return %c0_i32, %c0_i32_0 : i32, i32
  }
  func.func @transform_2(%arg0: i32) -> (i32, i32) {
    %c0_i32 = arith.constant 0 : i32
    %c0_i32_0 = arith.constant 0 : i32
    %c0_i32_1 = arith.constant 0 : i32
    return %c0_i32, %c0_i32_0 : i32, i32
  }
  func.func @transform_3(%arg0: i32) -> (i32, i32) {
    %c0_i32 = arith.constant 0 : i32
    %c0_i32_0 = arith.constant 0 : i32
    %c0_i32_1 = arith.constant 0 : i32
    return %c0_i32, %c0_i32_0 : i32, i32
  }
  func.func @transform_4(%arg0: i32) -> (i32, i32) {
    %c0_i32 = arith.constant 0 : i32
    %c0_i32_0 = arith.constant 0 : i32
    %c0_i32_1 = arith.constant 0 : i32
    return %c0_i32, %c0_i32_0 : i32, i32
  }
  func.func @transform_5(%arg0: i32) -> (i32, i32) {
    %c0_i32 = arith.constant 0 : i32
    %c0_i32_0 = arith.constant 0 : i32
    return %arg0, %c0_i32 : i32, i32
  }
  func.func @transform_6(%arg0: i32) -> (i32, i32) {
    %c0_i32 = arith.constant 0 : i32
    %c0_i32_0 = arith.constant 0 : i32
    return %arg0, %c0_i32 : i32, i32
  }
}

</mosaic_0001>

<llo_original>
// kernel: tpu_custom_call.1
$region0: #{tpu_custom_call.1}
  #allocation0 [shape = 'u32[]', space=smem, size = 0x4, offset = 0x4, fixed_abs, tag = 'smem constant byte address 0x4 - core index']
  #allocation1 [shape = 'u32[144,128]{1,0:T(1,128)}', space=vmem, size = 0x12000, scoped, tag = 'internal scratch']
  %s0 = inlined_call_operand.hbm [shape: bf16[128,896], index: 0, kind: input, shape index: {}]
  %s1 = inlined_call_operand.hbm [shape: bf16[896,128], index: 1, kind: input, shape index: {}]
  %s2 = inlined_call_operand.vmem [shape: f32[1,128], index: 2, kind: input, shape index: {}]
  %s3 = inlined_call_operand.vmem [shape: bf16[128,32], index: 3, kind: input, shape index: {}]
  %s4 = inlined_call_operand.vmem [shape: f32[1,32], index: 4, kind: input, shape index: {}]
  %s5 = inlined_call_operand.vmem [shape: f32[128,16], index: 5, kind: output, shape index: {0}]
  %s6 = inlined_call_operand.vmem [shape: f32[128,16], index: 6, kind: output, shape index: {1}]
  %7 = xla_tuple %s5, %s6
  %s8 = sld [smem:[#allocation0]]
  $region46: #{tpu_custom_call.1} parent=0
    _
  %s10 = ssub.s32 1, %s8
  %s11 = scalar_select 0, %s10, %s8
  $region1: #{tpu_custom_call.1} parent=0
    #allocation2 [shape = 'u8[229376]{0}', space=vmem, size = 0x38000, scoped, tag = 'input window, operand 0, single buffered']
    #allocation3 [shape = 's32[1]{0}', space=sflag, size = 0x4, scoped, tag = 'scoped memory for tpu_custom_call.1']
    #allocation4 [shape = 'u8[229376]{0}', space=vmem, size = 0x38000, scoped, tag = 'input window, operand 1, single buffered']
    #allocation5 [shape = 's32[1]{0}', space=sflag, size = 0x4, scoped, tag = 'scoped memory for tpu_custom_call.1']
    %12 = vsyncpa [#allocation3], 0
    %13 = vsyncpa [#allocation5], 0
    // Predicated region
    $region2: #{tpu_custom_call.1} parent=1 // pred_check
      _
    $region3: #{tpu_custom_call.1} parent=1 // pred_check_branch
      %15 = sbr.rel (0) target = $region5
    $region4: #{tpu_custom_call.1} parent=1 // pred_region
      %s17 = ssub.s32 7168, 7168
      %18 = vsyncadd [#allocation3], %s17
      %s19 = sshll.u32 [#allocation2], 4
      %s20 = int_to_ptr.vmem [resolvable:$true] %s19
      %25 = dma.hbm_to_vmem [thread:$0]  %s0, 7168, %s20, [#allocation3], 448, 448, 28
    $region5: #{tpu_custom_call.1} parent=1 // pred_fallthru
      _
    // Predicated region
    $region6: #{tpu_custom_call.1} parent=1 // pred_check
      _
    $region7: #{tpu_custom_call.1} parent=1 // pred_check_branch
      %27 = sbr.rel (0) target = $region9
    $region8: #{tpu_custom_call.1} parent=1 // pred_region
      %s29 = ssub.s32 7168, 7168
      %30 = vsyncadd [#allocation5], %s29
      %s31 = sshll.u32 [#allocation4], 4
      %s32 = int_to_ptr.vmem [resolvable:$true] %s31
      %37 = dma.hbm_to_vmem [thread:$0]  %s1, 7168, %s32, [#allocation5], 64, 64, 4
    $region9: #{tpu_custom_call.1} parent=1 // pred_fallthru
      _
    // Predicated region
    $region10: #{tpu_custom_call.1} parent=1 // pred_check
      _
    $region11: #{tpu_custom_call.1} parent=1 // pred_check_branch
      %39 = sbr.rel (0) target = $region13
    $region12: #{tpu_custom_call.1} parent=1 // pred_region
      _
    $region13: #{tpu_custom_call.1} parent=1 // pred_fallthru
      _
    // Predicated region
    $region14: #{tpu_custom_call.1} parent=1 // pred_check
      _
    $region15: #{tpu_custom_call.1} parent=1 // pred_check_branch
      %41 = sbr.rel (0) target = $region17
    $region16: #{tpu_custom_call.1} parent=1 // pred_region
      _
    $region17: #{tpu_custom_call.1} parent=1 // pred_fallthru
      _
    // Predicated region
    $region18: #{tpu_custom_call.1} parent=1 // pred_check
      _
    $region19: #{tpu_custom_call.1} parent=1 // pred_check_branch
      %43 = sbr.rel (0) target = $region21
    $region20: #{tpu_custom_call.1} parent=1 // pred_region
      _
    $region21: #{tpu_custom_call.1} parent=1 // pred_fallthru
      _
    // Predicated region
    $region22: #{tpu_custom_call.1} parent=1 // pred_check
      _
    $region23: #{tpu_custom_call.1} parent=1 // pred_check_branch
      %45 = sbr.rel (0) target = $region25
    $region24: #{tpu_custom_call.1} parent=1 // pred_region
      %46 = dma.done [#allocation3], 7168
    $region25: #{tpu_custom_call.1} parent=1 // pred_fallthru
      _
    // Predicated region
    $region26: #{tpu_custom_call.1} parent=1 // pred_check
      _
    $region27: #{tpu_custom_call.1} parent=1 // pred_check_branch
      %48 = sbr.rel (0) target = $region29
    $region28: #{tpu_custom_call.1} parent=1 // pred_region
      %49 = dma.done [#allocation5], 7168
    $region29: #{tpu_custom_call.1} parent=1 // pred_fallthru
      _
    %v51 = vld [vmem:[#allocation2] sm:$0xff]
    %v52 = vld [vmem:[#allocation2 + $0x8] sm:$0xff]
    %v53 = vld [vmem:[#allocation2 + $0x10] sm:$0xff]
    %v54 = vld [vmem:[#allocation2 + $0x18] sm:$0xf]
    %v55 = vld [vmem:[#allocation2 + $0x1c] sm:$0xff]
    %v56 = vld [vmem:[#allocation2 + $0x24] sm:$0xff]
    %v57 = vld [vmem:[#allocation2 + $0x2c] sm:$0xff]
    %v58 = vld [vmem:[#allocation2 + $0x34] sm:$0xf]
    %v59 = vld [vmem:[#allocation2 + $0x38] sm:$0xff]
    %v60 = vld [vmem:[#allocation2 + $0x40] sm:$0xff]
    %v61 = vld [vmem:[#allocation2 + $0x48] sm:$0xff]
    %v62 = vld [vmem:[#allocation2 + $0x50] sm:$0xf]
    %v63 = vld [vmem:[#allocation2 + $0x54] sm:$0xff]
    %v64 = vld [vmem:[#allocation2 + $0x5c] sm:$0xff]
    %v65 = vld [vmem:[#allocation2 + $0x64] sm:$0xff]
    %v66 = vld [vmem:[#allocation2 + $0x6c] sm:$0xf]
    %v67 = vld [vmem:[#allocation2 + $0x70] sm:$0xff]
    %v68 = vld [vmem:[#allocation2 + $0x78] sm:$0xff]
    %v69 = vld [vmem:[#allocation2 + $0x80] sm:$0xff]
    %v70 = vld [vmem:[#allocation2 + $0x88] sm:$0xf]
    %v71 = vld [vmem:[#allocation2 + $0x8c] sm:$0xff]
    %v72 = vld [vmem:[#allocation2 + $0x94] sm:$0xff]
    %v73 = vld [vmem:[#allocation2 + $0x9c] sm:$0xff]
    %v74 = vld [vmem:[#allocation2 + $0xa4] sm:$0xf]
    %v75 = vld [vmem:[#allocation2 + $0xa8] sm:$0xff]
    %v76 = vld [vmem:[#allocation2 + $0xb0] sm:$0xff]
    %v77 = vld [vmem:[#allocation2 + $0xb8] sm:$0xff]
    %v78 = vld [vmem:[#allocation2 + $0xc0] sm:$0xf]
    %v79 = vld [vmem:[#allocation2 + $0xc4] sm:$0xff]
    %v80 = vld [vmem:[#allocation2 + $0xcc] sm:$0xff]
    %v81 = vld [vmem:[#allocation2 + $0xd4] sm:$0xff]
    %v82 = vld [vmem:[#allocation2 + $0xdc] sm:$0xf]
    %v83 = vld [vmem:[#allocation2 + $0xe0] sm:$0xff]
    %v84 = vld [vmem:[#allocation2 + $0xe8] sm:$0xff]
    %v85 = vld [vmem:[#allocation2 + $0xf0] sm:$0xff]
    %v86 = vld [vmem:[#allocation2 + $0xf8] sm:$0xf]
    %v87 = vld [vmem:[#allocation2 + $0xfc] sm:$0xff]
    %v88 = vld [vmem:[#allocation2 + $0x104] sm:$0xff]
    %v89 = vld [vmem:[#allocation2 + $0x10c] sm:$0xff]
    %v90 = vld [vmem:[#allocation2 + $0x114] sm:$0xf]
    %v91 = vld [vmem:[#allocation2 + $0x118] sm:$0xff]
    %v92 = vld [vmem:[#allocation2 + $0x120] sm:$0xff]
    %v93 = vld [vmem:[#allocation2 + $0x128] sm:$0xff]
    %v94 = vld [vmem:[#allocation2 + $0x130] sm:$0xf]
    %v95 = vld [vmem:[#allocation2 + $0x134] sm:$0xff]
    %v96 = vld [vmem:[#allocation2 + $0x13c] sm:$0xff]
    %v97 = vld [vmem:[#allocation2 + $0x144] sm:$0xff]
    %v98 = vld [vmem:[#allocation2 + $0x14c] sm:$0xf]
    %v99 = vld [vmem:[#allocation2 + $0x150] sm:$0xff]
    %v100 = vld [vmem:[#allocation2 + $0x158] sm:$0xff]
    %v101 = vld [vmem:[#allocation2 + $0x160] sm:$0xff]
    %v102 = vld [vmem:[#allocation2 + $0x168] sm:$0xf]
    %v103 = vld [vmem:[#allocation2 + $0x16c] sm:$0xff]
    %v104 = vld [vmem:[#allocation2 + $0x174] sm:$0xff]
    %v105 = vld [vmem:[#allocation2 + $0x17c] sm:$0xff]
    %v106 = vld [vmem:[#allocation2 + $0x184] sm:$0xf]
    %v107 = vld [vmem:[#allocation2 + $0x188] sm:$0xff]
    %v108 = vld [vmem:[#allocation2 + $0x190] sm:$0xff]
    %v109 = vld [vmem:[#allocation2 + $0x198] sm:$0xff]
    %v110 = vld [vmem:[#allocation2 + $0x1a0] sm:$0xf]
    %v111 = vld [vmem:[#allocation2 + $0x1a4] sm:$0xff]
    %v112 = vld [vmem:[#allocation2 + $0x1ac] sm:$0xff]
    %v113 = vld [vmem:[#allocation2 + $0x1b4] sm:$0xff]
    %v114 = vld [vmem:[#allocation2 + $0x1bc] sm:$0xf]
    %v115 = vld [vmem:[#allocation4] sm:$0xf]
    %v116 = vld [vmem:[#allocation4 + $0x4] sm:$0xf]
    %v117 = vld [vmem:[#allocation4 + $0x8] sm:$0xf]
    %v118 = vld [vmem:[#allocation4 + $0xc] sm:$0xf]
    %v119 = vld [vmem:[#allocation4 + $0x10] sm:$0xf]
    %v120 = vld [vmem:[#allocation4 + $0x14] sm:$0xf]
    %v121 = vld [vmem:[#allocation4 + $0x18] sm:$0xf]
    %v122 = vld [vmem:[#allocation4 + $0x1c] sm:$0xf]
    %v123 = vld [vmem:[#allocation4 + $0x20] sm:$0xf]
    %v124 = vld [vmem:[#allocation4 + $0x24] sm:$0xf]
    %v125 = vld [vmem:[#allocation4 + $0x28] sm:$0xf]
    %v126 = vld [vmem:[#allocation4 + $0x2c] sm:$0xf]
    %v127 = vld [vmem:[#allocation4 + $0x30] sm:$0xf]
    %v128 = vld [vmem:[#allocation4 + $0x34] sm:$0xf]
    %v129 = vld [vmem:[#allocation4 + $0x38] sm:$0xf]
    %v130 = vld [vmem:[#allocation4 + $0x3c] sm:$0xf]
    %v131 = vld [vmem:[#allocation4 + $0x40] sm:$0xf]
    %v132 = vld [vmem:[#allocation4 + $0x44] sm:$0xf]
    %v133 = vld [vmem:[#allocation4 + $0x48] sm:$0xf]
    %v134 = vld [vmem:[#allocation4 + $0x4c] sm:$0xf]
    %v135 = vld [vmem:[#allocation4 + $0x50] sm:$0xf]
    %v136 = vld [vmem:[#allocation4 + $0x54] sm:$0xf]
    %v137 = vld [vmem:[#allocation4 + $0x58] sm:$0xf]
    %v138 = vld [vmem:[#allocation4 + $0x5c] sm:$0xf]
    %v139 = vld [vmem:[#allocation4 + $0x60] sm:$0xf]
    %v140 = vld [vmem:[#allocation4 + $0x64] sm:$0xf]
    %v141 = vld [vmem:[#allocation4 + $0x68] sm:$0xf]
    %v142 = vld [vmem:[#allocation4 + $0x6c] sm:$0xf]
    %v143 = vld [vmem:[#allocation4 + $0x70] sm:$0xf]
    %v144 = vld [vmem:[#allocation4 + $0x74] sm:$0xf]
    %v145 = vld [vmem:[#allocation4 + $0x78] sm:$0xf]
    %v146 = vld [vmem:[#allocation4 + $0x7c] sm:$0xf]
    %v147 = vld [vmem:[#allocation4 + $0x80] sm:$0xf]
    %v148 = vld [vmem:[#allocation4 + $0x84] sm:$0xf]
    %v149 = vld [vmem:[#allocation4 + $0x88] sm:$0xf]
    %v150 = vld [vmem:[#allocation4 + $0x8c] sm:$0xf]
    %v151 = vld [vmem:[#allocation4 + $0x90] sm:$0xf]
    %v152 = vld [vmem:[#allocation4 + $0x94] sm:$0xf]
    %v153 = vld [vmem:[#allocation4 + $0x98] sm:$0xf]
    %v154 = vld [vmem:[#allocation4 + $0x9c] sm:$0xf]
    %v155 = vld [vmem:[#allocation4 + $0xa0] sm:$0xf]
    %v156 = vld [vmem:[#allocation4 + $0xa4] sm:$0xf]
    %v157 = vld [vmem:[#allocation4 + $0xa8] sm:$0xf]
    %v158 = vld [vmem:[#allocation4 + $0xac] sm:$0xf]
    %v159 = vld [vmem:[#allocation4 + $0xb0] sm:$0xf]
    %v160 = vld [vmem:[#allocation4 + $0xb4] sm:$0xf]
    %v161 = vld [vmem:[#allocation4 + $0xb8] sm:$0xf]
    %v162 = vld [vmem:[#allocation4 + $0xbc] sm:$0xf]
    %v163 = vld [vmem:[#allocation4 + $0xc0] sm:$0xf]
    %v164 = vld [vmem:[#allocation4 + $0xc4] sm:$0xf]
    %v165 = vld [vmem:[#allocation4 + $0xc8] sm:$0xf]
    %v166 = vld [vmem:[#allocation4 + $0xcc] sm:$0xf]
    %v167 = vld [vmem:[#allocation4 + $0xd0] sm:$0xf]
    %v168 = vld [vmem:[#allocation4 + $0xd4] sm:$0xf]
    %v169 = vld [vmem:[#allocation4 + $0xd8] sm:$0xf]
    %v170 = vld [vmem:[#allocation4 + $0xdc] sm:$0xf]
    %v171 = vld [vmem:[#allocation4 + $0xe0] sm:$0xf]
    %v172 = vld [vmem:[#allocation4 + $0xe4] sm:$0xf]
    %v173 = vld [vmem:[#allocation4 + $0xe8] sm:$0xf]
    %v174 = vld [vmem:[#allocation4 + $0xec] sm:$0xf]
    %v175 = vld [vmem:[#allocation4 + $0xf0] sm:$0xf]
    %v176 = vld [vmem:[#allocation4 + $0xf4] sm:$0xf]
    %v177 = vld [vmem:[#allocation4 + $0xf8] sm:$0xf]
    %v178 = vld [vmem:[#allocation4 + $0xfc] sm:$0xf]
    %v179 = vld [vmem:[#allocation4 + $0x100] sm:$0xf]
    %v180 = vld [vmem:[#allocation4 + $0x104] sm:$0xf]
    %v181 = vld [vmem:[#allocation4 + $0x108] sm:$0xf]
    %v182 = vld [vmem:[#allocation4 + $0x10c] sm:$0xf]
    %v183 = vld [vmem:[#allocation4 + $0x110] sm:$0xf]
    %v184 = vld [vmem:[#allocation4 + $0x114] sm:$0xf]
    %v185 = vld [vmem:[#allocation4 + $0x118] sm:$0xf]
    %v186 = vld [vmem:[#allocation4 + $0x11c] sm:$0xf]
    %v187 = vld [vmem:[#allocation4 + $0x120] sm:$0xf]
    %v188 = vld [vmem:[#allocation4 + $0x124] sm:$0xf]
    %v189 = vld [vmem:[#allocation4 + $0x128] sm:$0xf]
    %v190 = vld [vmem:[#allocation4 + $0x12c] sm:$0xf]
    %v191 = vld [vmem:[#allocation4 + $0x130] sm:$0xf]
    %v192 = vld [vmem:[#allocation4 + $0x134] sm:$0xf]
    %v193 = vld [vmem:[#allocation4 + $0x138] sm:$0xf]
    %v194 = vld [vmem:[#allocation4 + $0x13c] sm:$0xf]
    %v195 = vld [vmem:[#allocation4 + $0x140] sm:$0xf]
    %v196 = vld [vmem:[#allocation4 + $0x144] sm:$0xf]
    %v197 = vld [vmem:[#allocation4 + $0x148] sm:$0xf]
    %v198 = vld [vmem:[#allocation4 + $0x14c] sm:$0xf]
    %v199 = vld [vmem:[#allocation4 + $0x150] sm:$0xf]
    %v200 = vld [vmem:[#allocation4 + $0x154] sm:$0xf]
    %v201 = vld [vmem:[#allocation4 + $0x158] sm:$0xf]
    %v202 = vld [vmem:[#allocation4 + $0x15c] sm:$0xf]
    %v203 = vld [vmem:[#allocation4 + $0x160] sm:$0xf]
    %v204 = vld [vmem:[#allocation4 + $0x164] sm:$0xf]
    %v205 = vld [vmem:[#allocation4 + $0x168] sm:$0xf]
    %v206 = vld [vmem:[#allocation4 + $0x16c] sm:$0xf]
    %v207 = vld [vmem:[#allocation4 + $0x170] sm:$0xf]
    %v208 = vld [vmem:[#allocation4 + $0x174] sm:$0xf]
    %v209 = vld [vmem:[#allocation4 + $0x178] sm:$0xf]
    %v210 = vld [vmem:[#allocation4 + $0x17c] sm:$0xf]
    %v211 = vld [vmem:[#allocation4 + $0x180] sm:$0xf]
    %v212 = vld [vmem:[#allocation4 + $0x184] sm:$0xf]
    %v213 = vld [vmem:[#allocation4 + $0x188] sm:$0xf]
    %v214 = vld [vmem:[#allocation4 + $0x18c] sm:$0xf]
    %v215 = vld [vmem:[#allocation4 + $0x190] sm:$0xf]
    %v216 = vld [vmem:[#allocation4 + $0x194] sm:$0xf]
    %v217 = vld [vmem:[#allocation4 + $0x198] sm:$0xf]
    %v218 = vld [vmem:[#allocation4 + $0x19c] sm:$0xf]
    %v219 = vld [vmem:[#allocation4 + $0x1a0] sm:$0xf]
    %v220 = vld [vmem:[#allocation4 + $0x1a4] sm:$0xf]
    %v221 = vld [vmem:[#allocation4 + $0x1a8] sm:$0xf]
    %v222 = vld [vmem:[#allocation4 + $0x1ac] sm:$0xf]
    %v223 = vld [vmem:[#allocation4 + $0x1b0] sm:$0xf]
    %v224 = vld [vmem:[#allocation4 + $0x1b4] sm:$0xf]
    %v225 = vld [vmem:[#allocation4 + $0x1b8] sm:$0xf]
    %v226 = vld [vmem:[#allocation4 + $0x1bc] sm:$0xf]
    %v227 = vld [vmem:[%s2] sm:$0x1]
    %v229 = vlaneseq
    %v230 = vshrl.u32 %v229, 7
    %v231 = vsub.s32 0, %v230
    %v232 = vrot.slane %v227, %v231
    %v298 = vunpack.c.l.b16 %v51
    %v299 = vunpack.c.h.b16 %v51
    %v300 = vunpack.c.l.b16 %v52
    %v301 = vunpack.c.h.b16 %v52
    %v302 = vunpack.c.l.b16 %v53
    %v303 = vunpack.c.h.b16 %v53
    %v304 = vunpack.c.l.b16 %v54
    %v305 = vunpack.c.l.b16 %v55
    %v306 = vunpack.c.h.b16 %v55
    %v307 = vunpack.c.l.b16 %v56
    %v308 = vunpack.c.h.b16 %v56
    %v309 = vunpack.c.l.b16 %v57
    %v310 = vunpack.c.h.b16 %v57
    %v311 = vunpack.c.l.b16 %v58
    %v312 = vunpack.c.l.b16 %v59
    %v313 = vunpack.c.h.b16 %v59
    %v314 = vunpack.c.l.b16 %v60
    %v315 = vunpack.c.h.b16 %v60
    %v316 = vunpack.c.l.b16 %v61
    %v317 = vunpack.c.h.b16 %v61
    %v318 = vunpack.c.l.b16 %v62
    %v319 = vunpack.c.l.b16 %v63
    %v320 = vunpack.c.h.b16 %v63
    %v321 = vunpack.c.l.b16 %v64
    %v322 = vunpack.c.h.b16 %v64
    %v323 = vunpack.c.l.b16 %v65
    %v324 = vunpack.c.h.b16 %v65
    %v325 = vunpack.c.l.b16 %v66
    %v326 = vunpack.c.l.b16 %v67
    %v327 = vunpack.c.h.b16 %v67
    %v328 = vunpack.c.l.b16 %v68
    %v329 = vunpack.c.h.b16 %v68
    %v330 = vunpack.c.l.b16 %v69
    %v331 = vunpack.c.h.b16 %v69
    %v332 = vunpack.c.l.b16 %v70
    %v333 = vunpack.c.l.b16 %v71
    %v334 = vunpack.c.h.b16 %v71
    %v335 = vunpack.c.l.b16 %v72
    %v336 = vunpack.c.h.b16 %v72
    %v337 = vunpack.c.l.b16 %v73
    %v338 = vunpack.c.h.b16 %v73
    %v339 = vunpack.c.l.b16 %v74
    %v340 = vunpack.c.l.b16 %v75
    %v341 = vunpack.c.h.b16 %v75
    %v342 = vunpack.c.l.b16 %v76
    %v343 = vunpack.c.h.b16 %v76
    %v344 = vunpack.c.l.b16 %v77
    %v345 = vunpack.c.h.b16 %v77
    %v346 = vunpack.c.l.b16 %v78
    %v347 = vunpack.c.l.b16 %v79
    %v348 = vunpack.c.h.b16 %v79
    %v349 = vunpack.c.l.b16 %v80
    %v350 = vunpack.c.h.b16 %v80
    %v351 = vunpack.c.l.b16 %v81
    %v352 = vunpack.c.h.b16 %v81
    %v353 = vunpack.c.l.b16 %v82
    %v354 = vunpack.c.l.b16 %v83
    %v355 = vunpack.c.h.b16 %v83
    %v356 = vunpack.c.l.b16 %v84
    %v357 = vunpack.c.h.b16 %v84
    %v358 = vunpack.c.l.b16 %v85
    %v359 = vunpack.c.h.b16 %v85
    %v360 = vunpack.c.l.b16 %v86
    %v361 = vunpack.c.l.b16 %v87
    %v362 = vunpack.c.h.b16 %v87
    %v363 = vunpack.c.l.b16 %v88
    %v364 = vunpack.c.h.b16 %v88
    %v365 = vunpack.c.l.b16 %v89
    %v366 = vunpack.c.h.b16 %v89
    %v367 = vunpack.c.l.b16 %v90
    %v368 = vunpack.c.l.b16 %v91
    %v369 = vunpack.c.h.b16 %v91
    %v370 = vunpack.c.l.b16 %v92
    %v371 = vunpack.c.h.b16 %v92
    %v372 = vunpack.c.l.b16 %v93
    %v373 = vunpack.c.h.b16 %v93
    %v374 = vunpack.c.l.b16 %v94
    %v375 = vunpack.c.l.b16 %v95
    %v376 = vunpack.c.h.b16 %v95
    %v377 = vunpack.c.l.b16 %v96
    %v378 = vunpack.c.h.b16 %v96
    %v379 = vunpack.c.l.b16 %v97
    %v380 = vunpack.c.h.b16 %v97
    %v381 = vunpack.c.l.b16 %v98
    %v382 = vunpack.c.l.b16 %v99
    %v383 = vunpack.c.h.b16 %v99
    %v384 = vunpack.c.l.b16 %v100
    %v385 = vunpack.c.h.b16 %v100
    %v386 = vunpack.c.l.b16 %v101
    %v387 = vunpack.c.h.b16 %v101
    %v388 = vunpack.c.l.b16 %v102
    %v389 = vunpack.c.l.b16 %v103
    %v390 = vunpack.c.h.b16 %v103
    %v391 = vunpack.c.l.b16 %v104
    %v392 = vunpack.c.h.b16 %v104
    %v393 = vunpack.c.l.b16 %v105
    %v394 = vunpack.c.h.b16 %v105
    %v395 = vunpack.c.l.b16 %v106
    %v396 = vunpack.c.l.b16 %v107
    %v397 = vunpack.c.h.b16 %v107
    %v398 = vunpack.c.l.b16 %v108
    %v399 = vunpack.c.h.b16 %v108
    %v400 = vunpack.c.l.b16 %v109
    %v401 = vunpack.c.h.b16 %v109
    %v402 = vunpack.c.l.b16 %v110
    %v403 = vunpack.c.l.b16 %v111
    %v404 = vunpack.c.h.b16 %v111
    %v405 = vunpack.c.l.b16 %v112
    %v406 = vunpack.c.h.b16 %v112
    %v407 = vunpack.c.l.b16 %v113
    %v408 = vunpack.c.h.b16 %v113
    %v409 = vunpack.c.l.b16 %v114
    %v410 = vpack.c.b16 %v305, %v298
    %v411 = vpack.c.b16 %v306, %v299
    %v412 = vpack.c.b16 %v307, %v300
    %v413 = vpack.c.b16 %v308, %v301
    %v414 = vpack.c.b16 %v309, %v302
    %v415 = vpack.c.b16 %v310, %v303
    %v416 = vpack.c.b16 %v311, %v304
    %v417 = vpack.c.b16 %v319, %v312
    %v418 = vpack.c.b16 %v320, %v313
    %v419 = vpack.c.b16 %v321, %v314
    %v420 = vpack.c.b16 %v322, %v315
    %v421 = vpack.c.b16 %v323, %v316
    %v422 = vpack.c.b16 %v324, %v317
    %v423 = vpack.c.b16 %v325, %v318
    %v424 = vpack.c.b16 %v333, %v326
    %v425 = vpack.c.b16 %v334, %v327
    %v426 = vpack.c.b16 %v335, %v328
    %v427 = vpack.c.b16 %v336, %v329
    %v428 = vpack.c.b16 %v337, %v330
    %v429 = vpack.c.b16 %v338, %v331
    %v430 = vpack.c.b16 %v339, %v332
    %v431 = vpack.c.b16 %v347, %v340
    %v432 = vpack.c.b16 %v348, %v341
    %v433 = vpack.c.b16 %v349, %v342
    %v434 = vpack.c.b16 %v350, %v343
    %v435 = vpack.c.b16 %v351, %v344
    %v436 = vpack.c.b16 %v352, %v345
    %v437 = vpack.c.b16 %v353, %v346
    %v438 = vpack.c.b16 %v361, %v354
    %v439 = vpack.c.b16 %v362, %v355
    %v440 = vpack.c.b16 %v363, %v356
    %v441 = vpack.c.b16 %v364, %v357
    %v442 = vpack.c.b16 %v365, %v358
    %v443 = vpack.c.b16 %v366, %v359
    %v444 = vpack.c.b16 %v367, %v360
    %v445 = vpack.c.b16 %v375, %v368
    %v446 = vpack.c.b16 %v376, %v369
    %v447 = vpack.c.b16 %v377, %v370
    %v448 = vpack.c.b16 %v378, %v371
    %v449 = vpack.c.b16 %v379, %v372
    %v450 = vpack.c.b16 %v380, %v373
    %v451 = vpack.c.b16 %v381, %v374
    %v452 = vpack.c.b16 %v389, %v382
    %v453 = vpack.c.b16 %v390, %v383
    %v454 = vpack.c.b16 %v391, %v384
    %v455 = vpack.c.b16 %v392, %v385
    %v456 = vpack.c.b16 %v393, %v386
    %v457 = vpack.c.b16 %v394, %v387
    %v458 = vpack.c.b16 %v395, %v388
    %v459 = vpack.c.b16 %v403, %v396
    %v460 = vpack.c.b16 %v404, %v397
    %v461 = vpack.c.b16 %v405, %v398
    %v462 = vpack.c.b16 %v406, %v399
    %v463 = vpack.c.b16 %v407, %v400
    %v464 = vpack.c.b16 %v408, %v401
    %v465 = vpack.c.b16 %v409, %v402
    %v634 = vunpack.c.l.b16 %v115
    %v635 = vunpack.c.l.b16 %v116
    %v636 = vunpack.c.l.b16 %v117
    %v637 = vunpack.c.l.b16 %v118
    %v638 = vunpack.c.l.b16 %v119
    %v639 = vunpack.c.l.b16 %v120
    %v640 = vunpack.c.l.b16 %v121
    %v641 = vunpack.c.l.b16 %v122
    %v642 = vunpack.c.l.b16 %v123
    %v643 = vunpack.c.l.b16 %v124
    %v644 = vunpack.c.l.b16 %v125
    %v645 = vunpack.c.l.b16 %v126
    %v646 = vunpack.c.l.b16 %v127
    %v647 = vunpack.c.l.b16 %v128
    %v648 = vunpack.c.l.b16 %v129
    %v649 = vunpack.c.l.b16 %v130
    %v650 = vunpack.c.l.b16 %v131
    %v651 = vunpack.c.l.b16 %v132
    %v652 = vunpack.c.l.b16 %v133
    %v653 = vunpack.c.l.b16 %v134
    %v654 = vunpack.c.l.b16 %v135
    %v655 = vunpack.c.l.b16 %v136
    %v656 = vunpack.c.l.b16 %v137
    %v657 = vunpack.c.l.b16 %v138
    %v658 = vunpack.c.l.b16 %v139
    %v659 = vunpack.c.l.b16 %v140
    %v660 = vunpack.c.l.b16 %v141
    %v661 = vunpack.c.l.b16 %v142
    %v662 = vunpack.c.l.b16 %v143
    %v663 = vunpack.c.l.b16 %v144
    %v664 = vunpack.c.l.b16 %v145
    %v665 = vunpack.c.l.b16 %v146
    %v666 = vunpack.c.l.b16 %v147
    %v667 = vunpack.c.l.b16 %v148
    %v668 = vunpack.c.l.b16 %v149
    %v669 = vunpack.c.l.b16 %v150
    %v670 = vunpack.c.l.b16 %v151
    %v671 = vunpack.c.l.b16 %v152
    %v672 = vunpack.c.l.b16 %v153
    %v673 = vunpack.c.l.b16 %v154
    %v674 = vunpack.c.l.b16 %v155
    %v675 = vunpack.c.l.b16 %v156
    %v676 = vunpack.c.l.b16 %v157
    %v677 = vunpack.c.l.b16 %v158
    %v678 = vunpack.c.l.b16 %v159
    %v679 = vunpack.c.l.b16 %v160
    %v680 = vunpack.c.l.b16 %v161
    %v681 = vunpack.c.l.b16 %v162
    %v682 = vunpack.c.l.b16 %v163
    %v683 = vunpack.c.l.b16 %v164
    %v684 = vunpack.c.l.b16 %v165
    %v685 = vunpack.c.l.b16 %v166
    %v686 = vunpack.c.l.b16 %v167
    %v687 = vunpack.c.l.b16 %v168
    %v688 = vunpack.c.l.b16 %v169
    %v689 = vunpack.c.l.b16 %v170
    %v690 = vunpack.c.l.b16 %v171
    %v691 = vunpack.c.l.b16 %v172
    %v692 = vunpack.c.l.b16 %v173
    %v693 = vunpack.c.l.b16 %v174
    %v694 = vunpack.c.l.b16 %v175
    %v695 = vunpack.c.l.b16 %v176
    %v696 = vunpack.c.l.b16 %v177
    %v697 = vunpack.c.l.b16 %v178
    %v698 = vunpack.c.l.b16 %v179
    %v699 = vunpack.c.l.b16 %v180
    %v700 = vunpack.c.l.b16 %v181
    %v701 = vunpack.c.l.b16 %v182
    %v702 = vunpack.c.l.b16 %v183
    %v703 = vunpack.c.l.b16 %v184
    %v704 = vunpack.c.l.b16 %v185
    %v705 = vunpack.c.l.b16 %v186
    %v706 = vunpack.c.l.b16 %v187
    %v707 = vunpack.c.l.b16 %v188
    %v708 = vunpack.c.l.b16 %v189
    %v709 = vunpack.c.l.b16 %v190
    %v710 = vunpack.c.l.b16 %v191
    %v711 = vunpack.c.l.b16 %v192
    %v712 = vunpack.c.l.b16 %v193
    %v713 = vunpack.c.l.b16 %v194
    %v714 = vunpack.c.l.b16 %v195
    %v715 = vunpack.c.l.b16 %v196
    %v716 = vunpack.c.l.b16 %v197
    %v717 = vunpack.c.l.b16 %v198
    %v718 = vunpack.c.l.b16 %v199
    %v719 = vunpack.c.l.b16 %v200
    %v720 = vunpack.c.l.b16 %v201
    %v721 = vunpack.c.l.b16 %v202
    %v722 = vunpack.c.l.b16 %v203
    %v723 = vunpack.c.l.b16 %v204
    %v724 = vunpack.c.l.b16 %v205
    %v725 = vunpack.c.l.b16 %v206
    %v726 = vunpack.c.l.b16 %v207
    %v727 = vunpack.c.l.b16 %v208
    %v728 = vunpack.c.l.b16 %v209
    %v729 = vunpack.c.l.b16 %v210
    %v730 = vunpack.c.l.b16 %v211
    %v731 = vunpack.c.l.b16 %v212
    %v732 = vunpack.c.l.b16 %v213
    %v733 = vunpack.c.l.b16 %v214
    %v734 = vunpack.c.l.b16 %v215
    %v735 = vunpack.c.l.b16 %v216
    %v736 = vunpack.c.l.b16 %v217
    %v737 = vunpack.c.l.b16 %v218
    %v738 = vunpack.c.l.b16 %v219
    %v739 = vunpack.c.l.b16 %v220
    %v740 = vunpack.c.l.b16 %v221
    %v741 = vunpack.c.l.b16 %v222
    %v742 = vunpack.c.l.b16 %v223
    %v743 = vunpack.c.l.b16 %v224
    %v744 = vunpack.c.l.b16 %v225
    %v745 = vunpack.c.l.b16 %v226
    %v746 = vpack.c.b16 %v635, %v634
    %v747 = vpack.c.b16 %v637, %v636
    %v748 = vpack.c.b16 %v639, %v638
    %v749 = vpack.c.b16 %v641, %v640
    %v750 = vpack.c.b16 %v643, %v642
    %v751 = vpack.c.b16 %v645, %v644
    %v752 = vpack.c.b16 %v647, %v646
    %v753 = vpack.c.b16 %v649, %v648
    %v754 = vpack.c.b16 %v651, %v650
    %v755 = vpack.c.b16 %v653, %v652
    %v756 = vpack.c.b16 %v655, %v654
    %v757 = vpack.c.b16 %v657, %v656
    %v758 = vpack.c.b16 %v659, %v658
    %v759 = vpack.c.b16 %v661, %v660
    %v760 = vpack.c.b16 %v663, %v662
    %v761 = vpack.c.b16 %v665, %v664
    %v762 = vpack.c.b16 %v667, %v666
    %v763 = vpack.c.b16 %v669, %v668
    %v764 = vpack.c.b16 %v671, %v670
    %v765 = vpack.c.b16 %v673, %v672
    %v766 = vpack.c.b16 %v675, %v674
    %v767 = vpack.c.b16 %v677, %v676
    %v768 = vpack.c.b16 %v679, %v678
    %v769 = vpack.c.b16 %v681, %v680
    %v770 = vpack.c.b16 %v683, %v682
    %v771 = vpack.c.b16 %v685, %v684
    %v772 = vpack.c.b16 %v687, %v686
    %v773 = vpack.c.b16 %v689, %v688
    %v774 = vpack.c.b16 %v691, %v690
    %v775 = vpack.c.b16 %v693, %v692
    %v776 = vpack.c.b16 %v695, %v694
    %v777 = vpack.c.b16 %v697, %v696
    %v778 = vpack.c.b16 %v699, %v698
    %v779 = vpack.c.b16 %v701, %v700
    %v780 = vpack.c.b16 %v703, %v702
    %v781 = vpack.c.b16 %v705, %v704
    %v782 = vpack.c.b16 %v707, %v706
    %v783 = vpack.c.b16 %v709, %v708
    %v784 = vpack.c.b16 %v711, %v710
    %v785 = vpack.c.b16 %v713, %v712
    %v786 = vpack.c.b16 %v715, %v714
    %v787 = vpack.c.b16 %v717, %v716
    %v788 = vpack.c.b16 %v719, %v718
    %v789 = vpack.c.b16 %v721, %v720
    %v790 = vpack.c.b16 %v723, %v722
    %v791 = vpack.c.b16 %v725, %v724
    %v792 = vpack.c.b16 %v727, %v726
    %v793 = vpack.c.b16 %v729, %v728
    %v794 = vpack.c.b16 %v731, %v730
    %v795 = vpack.c.b16 %v733, %v732
    %v796 = vpack.c.b16 %v735, %v734
    %v797 = vpack.c.b16 %v737, %v736
    %v798 = vpack.c.b16 %v739, %v738
    %v799 = vpack.c.b16 %v741, %v740
    %v800 = vpack.c.b16 %v743, %v742
    %v801 = vpack.c.b16 %v745, %v744
    %858 = vmatprep.subr.bf16.mxu0 0
    %859 = vmatpush1.bf16.msra.mxu0 %v746
    %860 = vmatprep.subr.bf16.mxu0 0
    %861 = vmatpush1.bf16.msra.mxu0 %v747
    %862 = vmatprep.subr.bf16.mxu0 0
    %863 = vmatpush1.bf16.msra.mxu0 %v748
    %864 = vmatprep.subr.bf16.mxu0 0
    %865 = vmatpush1.bf16.msra.mxu0 %v749
    %866 = vmatprep.subr.bf16.mxu0 0
    %867 = vmatpush1.bf16.msra.mxu0 %v750
    %868 = vmatprep.subr.bf16.mxu0 0
    %869 = vmatpush1.bf16.msra.mxu0 %v751
    %870 = vmatprep.subr.bf16.mxu0 0
    %871 = vmatpush1.bf16.msra.mxu0 %v752
    %872 = vmatprep.subr.bf16.mxu0 0
    %873 = vmatpush1.bf16.msra.mxu0 %v753
    %874 = vmatprep.subr.bf16.mxu0 0
    %875 = vmatpush1.bf16.msra.mxu0 %v754
    %876 = vmatprep.subr.bf16.mxu0 0
    %877 = vmatpush1.bf16.msra.mxu0 %v755
    %878 = vmatprep.subr.bf16.mxu0 0
    %879 = vmatpush1.bf16.msra.mxu0 %v756
    %880 = vmatprep.subr.bf16.mxu0 0
    %881 = vmatpush1.bf16.msra.mxu0 %v757
    %882 = vmatprep.subr.bf16.mxu0 0
    %883 = vmatpush1.bf16.msra.mxu0 %v758
    %884 = vmatprep.subr.bf16.mxu0 0
    %885 = vmatpush1.bf16.msra.mxu0 %v759
    %886 = vmatprep.subr.bf16.mxu0 0
    %887 = vmatpush1.bf16.msra.mxu0 %v760
    %888 = vmatprep.subr.bf16.mxu0 0
    %889 = vmatpush1.bf16.msra.mxu0 %v761
    %890 = vmatprep.mubr.bf16.mxu0 %v411
    %891 = vmatmul.mubr.bf16.gmra.mrb[0].mxu0 %v410
    %v892 = vpop.f32.mrb[0].mxu0
    %v893 = vadd.f32 %v232, %v892
    %v894 = vpop.f32.mrb[0].mxu0
    %v895 = vpop.f32.mrb[0].mxu0
    %v896 = vadd.f32 %v232, %v895
    %v897 = vpop.f32.mrb[0].mxu0
    %898 = vmatprep.mubr.bf16.mxu0 %v418
    %899 = vmatmul.mubr.bf16.gmra.mrb[0].mxu0 %v417
    %v900 = vpop.f32.mrb[0].mxu0
    %v901 = vadd.f32 %v232, %v900
    %v902 = vpop.f32.mrb[0].mxu0
    %v903 = vpop.f32.mrb[0].mxu0
    %v904 = vadd.f32 %v232, %v903
    %v905 = vpop.f32.mrb[0].mxu0
    %906 = vmatprep.mubr.bf16.mxu0 %v425
    %907 = vmatmul.mubr.bf16.gmra.mrb[0].mxu0 %v424
    %v908 = vpop.f32.mrb[0].mxu0
    %v909 = vadd.f32 %v232, %v908
    %v910 = vpop.f32.mrb[0].mxu0
    %v911 = vpop.f32.mrb[0].mxu0
    %v912 = vadd.f32 %v232, %v911
    %v913 = vpop.f32.mrb[0].mxu0
    %914 = vmatprep.mubr.bf16.mxu0 %v432
    %915 = vmatmul.mubr.bf16.gmra.mrb[0].mxu0 %v431
    %v916 = vpop.f32.mrb[0].mxu0
    %v917 = vadd.f32 %v232, %v916
    %v918 = vpop.f32.mrb[0].mxu0
    %v919 = vpop.f32.mrb[0].mxu0
    %v920 = vadd.f32 %v232, %v919
    %v921 = vpop.f32.mrb[0].mxu0
    %922 = vmatprep.mubr.bf16.mxu0 %v439
    %923 = vmatmul.mubr.bf16.gmra.mrb[0].mxu0 %v438
    %v924 = vpop.f32.mrb[0].mxu0
    %v925 = vadd.f32 %v232, %v924
    %v926 = vpop.f32.mrb[0].mxu0
    %v927 = vpop.f32.mrb[0].mxu0
    %v928 = vadd.f32 %v232, %v927
    %v929 = vpop.f32.mrb[0].mxu0
    %930 = vmatprep.mubr.bf16.mxu0 %v446
    %931 = vmatmul.mubr.bf16.gmra.mrb[0].mxu0 %v445
    %v932 = vpop.f32.mrb[0].mxu0
    %v933 = vadd.f32 %v232, %v932
    %v934 = vpop.f32.mrb[0].mxu0
    %v935 = vpop.f32.mrb[0].mxu0
    %v936 = vadd.f32 %v232, %v935
    %v937 = vpop.f32.mrb[0].mxu0
    %938 = vmatprep.mubr.bf16.mxu0 %v453
    %939 = vmatmul.mubr.bf16.gmra.mrb[0].mxu0 %v452
    %v940 = vpop.f32.mrb[0].mxu0
    %v941 = vadd.f32 %v232, %v940
    %v942 = vpop.f32.mrb[0].mxu0
    %v943 = vpop.f32.mrb[0].mxu0
    %v944 = vadd.f32 %v232, %v943
    %v945 = vpop.f32.mrb[0].mxu0
    %946 = vmatprep.mubr.bf16.mxu0 %v460
    %947 = vmatmul.mubr.bf16.gmra.mrb[0].mxu0 %v459
    %v948 = vpop.f32.mrb[0].mxu0
    %v949 = vadd.f32 %v232, %v948
    %v950 = vpop.f32.mrb[0].mxu0
    %v951 = vpop.f32.mrb[0].mxu0
    %v952 = vadd.f32 %v232, %v951
    %v953 = vpop.f32.mrb[0].mxu0
    %954 = vdwg.mxu0
    %955 = vmatprep.subr.bf16.mxu0 0
    %956 = vmatpush1.bf16.msra.mxu0 %v762
    %957 = vmatprep.subr.bf16.mxu0 0
    %958 = vmatpush1.bf16.msra.mxu0 %v763
    %959 = vmatprep.subr.bf16.mxu0 0
    %960 = vmatpush1.bf16.msra.mxu0 %v764
    %961 = vmatprep.subr.bf16.mxu0 0
    %962 = vmatpush1.bf16.msra.mxu0 %v765
    %963 = vmatprep.subr.bf16.mxu0 0
    %964 = vmatpush1.bf16.msra.mxu0 %v766
    %965 = vmatprep.subr.bf16.mxu0 0
    %966 = vmatpush1.bf16.msra.mxu0 %v767
    %967 = vmatprep.subr.bf16.mxu0 0
    %968 = vmatpush1.bf16.msra.mxu0 %v768
    %969 = vmatprep.subr.bf16.mxu0 0
    %970 = vmatpush1.bf16.msra.mxu0 %v769
    %971 = vmatprep.subr.bf16.mxu0 0
    %972 = vmatpush1.bf16.msra.mxu0 %v770
    %973 = vmatprep.subr.bf16.mxu0 0
    %974 = vmatpush1.bf16.msra.mxu0 %v771
    %975 = vmatprep.subr.bf16.mxu0 0
    %976 = vmatpush1.bf16.msra.mxu0 %v772
    %977 = vmatprep.subr.bf16.mxu0 0
    %978 = vmatpush1.bf16.msra.mxu0 %v773
    %979 = vmatprep.subr.bf16.mxu0 0
    %980 = vmatpush1.bf16.msra.mxu0 %v774
    %981 = vmatprep.subr.bf16.mxu0 0
    %982 = vmatpush1.bf16.msra.mxu0 %v775
    %983 = vmatprep.subr.bf16.mxu0 0
    %984 = vmatpush1.bf16.msra.mxu0 %v776
    %985 = vmatprep.subr.bf16.mxu0 0
    %986 = vmatpush1.bf16.msra.mxu0 %v777
    %987 = vmatprep.mubr.bf16.mxu0 %v413
    %988 = vmatmul.mubr.bf16.gmra.mrb[0].mxu0 %v412
    %v989 = vpop.f32.mrb[0].mxu0
    %v990 = vadd.f32 %v893, %v989
    %v991 = vpop.f32.mrb[0].mxu0
    %v992 = vpop.f32.mrb[0].mxu0
    %v993 = vadd.f32 %v896, %v992
    %v994 = vpop.f32.mrb[0].mxu0
    %995 = vmatprep.mubr.bf16.mxu0 %v420
    %996 = vmatmul.mubr.bf16.gmra.mrb[0].mxu0 %v419
    %v997 = vpop.f32.mrb[0].mxu0
    %v998 = vadd.f32 %v901, %v997
    %v999 = vpop.f32.mrb[0].mxu0
    %v1000 = vpop.f32.mrb[0].mxu0
    %v1001 = vadd.f32 %v904, %v1000
    %v1002 = vpop.f32.mrb[0].mxu0
    %1003 = vmatprep.mubr.bf16.mxu0 %v427
    %1004 = vmatmul.mubr.bf16.gmra.mrb[0].mxu0 %v426
    %v1005 = vpop.f32.mrb[0].mxu0
    %v1006 = vadd.f32 %v909, %v1005
    %v1007 = vpop.f32.mrb[0].mxu0
    %v1008 = vpop.f32.mrb[0].mxu0
    %v1009 = vadd.f32 %v912, %v1008
    %v1010 = vpop.f32.mrb[0].mxu0
    %1011 = vmatprep.mubr.bf16.mxu0 %v434
    %1012 = vmatmul.mubr.bf16.gmra.mrb[0].mxu0 %v433
    %v1013 = vpop.f32.mrb[0].mxu0
    %v1014 = vadd.f32 %v917, %v1013
    %v1015 = vpop.f32.mrb[0].mxu0
    %v1016 = vpop.f32.mrb[0].mxu0
    %v1017 = vadd.f32 %v920, %v1016
    %v1018 = vpop.f32.mrb[0].mxu0
    %1019 = vmatprep.mubr.bf16.mxu0 %v441
    %1020 = vmatmul.mubr.bf16.gmra.mrb[0].mxu0 %v440
    %v1021 = vpop.f32.mrb[0].mxu0
    %v1022 = vadd.f32 %v925, %v1021
    %v1023 = vpop.f32.mrb[0].mxu0
    %v1024 = vpop.f32.mrb[0].mxu0
    %v1025 = vadd.f32 %v928, %v1024
    %v1026 = vpop.f32.mrb[0].mxu0
    %1027 = vmatprep.mubr.bf16.mxu0 %v448
    %1028 = vmatmul.mubr.bf16.gmra.mrb[0].mxu0 %v447
    %v1029 = vpop.f32.mrb[0].mxu0
    %v1030 = vadd.f32 %v933, %v1029
    %v1031 = vpop.f32.mrb[0].mxu0
    %v1032 = vpop.f32.mrb[0].mxu0
    %v1033 = vadd.f32 %v936, %v1032
    %v1034 = vpop.f32.mrb[0].mxu0
    %1035 = vmatprep.mubr.bf16.mxu0 %v455
    %1036 = vmatmul.mubr.bf16.gmra.mrb[0].mxu0 %v454
    %v1037 = vpop.f32.mrb[0].mxu0
    %v1038 = vadd.f32 %v941, %v1037
    %v1039 = vpop.f32.mrb[0].mxu0
    %v1040 = vpop.f32.mrb[0].mxu0
    %v1041 = vadd.f32 %v944, %v1040
    %v1042 = vpop.f32.mrb[0].mxu0
    %1043 = vmatprep.mubr.bf16.mxu0 %v462
    %1044 = vmatmul.mubr.bf16.gmra.mrb[0].mxu0 %v461
    %v1045 = vpop.f32.mrb[0].mxu0
    %v1046 = vadd.f32 %v949, %v1045
    %v1047 = vpop.f32.mrb[0].mxu0
    %v1048 = vpop.f32.mrb[0].mxu0
    %v1049 = vadd.f32 %v952, %v1048
    %v1050 = vpop.f32.mrb[0].mxu0
    %1051 = vdwg.mxu0
    %1052 = vmatprep.subr.bf16.mxu0 0
    %1053 = vmatpush1.bf16.msra.mxu0 %v778
    %1054 = vmatprep.subr.bf16.mxu0 0
    %1055 = vmatpush1.bf16.msra.mxu0 %v779
    %1056 = vmatprep.subr.bf16.mxu0 0
    %1057 = vmatpush1.bf16.msra.mxu0 %v780
    %1058 = vmatprep.subr.bf16.mxu0 0
    %1059 = vmatpush1.bf16.msra.mxu0 %v781
    %1060 = vmatprep.subr.bf16.mxu0 0
    %1061 = vmatpush1.bf16.msra.mxu0 %v782
    %1062 = vmatprep.subr.bf16.mxu0 0
    %1063 = vmatpush1.bf16.msra.mxu0 %v783
    %1064 = vmatprep.subr.bf16.mxu0 0
    %1065 = vmatpush1.bf16.msra.mxu0 %v784
    %1066 = vmatprep.subr.bf16.mxu0 0
    %1067 = vmatpush1.bf16.msra.mxu0 %v785
    %1068 = vmatprep.subr.bf16.mxu0 0
    %1069 = vmatpush1.bf16.msra.mxu0 %v786
    %1070 = vmatprep.subr.bf16.mxu0 0
    %1071 = vmatpush1.bf16.msra.mxu0 %v787
    %1072 = vmatprep.subr.bf16.mxu0 0
    %1073 = vmatpush1.bf16.msra.mxu0 %v788
    %1074 = vmatprep.subr.bf16.mxu0 0
    %1075 = vmatpush1.bf16.msra.mxu0 %v789
    %1076 = vmatprep.subr.bf16.mxu0 0
    %1077 = vmatpush1.bf16.msra.mxu0 %v790
    %1078 = vmatprep.subr.bf16.mxu0 0
    %1079 = vmatpush1.bf16.msra.mxu0 %v791
    %1080 = vmatprep.subr.bf16.mxu0 0
    %1081 = vmatpush1.bf16.msra.mxu0 %v792
    %1082 = vmatprep.subr.bf16.mxu0 0
    %1083 = vmatpush1.bf16.msra.mxu0 %v793
    %1084 = vmatprep.mubr.bf16.mxu0 %v415
    %1085 = vmatmul.mubr.bf16.gmra.mrb[0].mxu0 %v414
    %v1086 = vpop.f32.mrb[0].mxu0
    %v1087 = vadd.f32 %v990, %v1086
    %v1088 = vpop.f32.mrb[0].mxu0
    %v1089 = vpop.f32.mrb[0].mxu0
    %v1090 = vadd.f32 %v993, %v1089
    %v1091 = vpop.f32.mrb[0].mxu0
    %1092 = vmatprep.mubr.bf16.mxu0 %v422
    %1093 = vmatmul.mubr.bf16.gmra.mrb[0].mxu0 %v421
    %v1094 = vpop.f32.mrb[0].mxu0
    %v1095 = vadd.f32 %v998, %v1094
    %v1096 = vpop.f32.mrb[0].mxu0
    %v1097 = vpop.f32.mrb[0].mxu0
    %v1098 = vadd.f32 %v1001, %v1097
    %v1099 = vpop.f32.mrb[0].mxu0
    %1100 = vmatprep.mubr.bf16.mxu0 %v429
    %1101 = vmatmul.mubr.bf16.gmra.mrb[0].mxu0 %v428
    %v1102 = vpop.f32.mrb[0].mxu0
    %v1103 = vadd.f32 %v1006, %v1102
    %v1104 = vpop.f32.mrb[0].mxu0
    %v1105 = vpop.f32.mrb[0].mxu0
    %v1106 = vadd.f32 %v1009, %v1105
    %v1107 = vpop.f32.mrb[0].mxu0
    %1108 = vmatprep.mubr.bf16.mxu0 %v436
    %1109 = vmatmul.mubr.bf16.gmra.mrb[0].mxu0 %v435
    %v1110 = vpop.f32.mrb[0].mxu0
    %v1111 = vadd.f32 %v1014, %v1110
    %v1112 = vpop.f32.mrb[0].mxu0
    %v1113 = vpop.f32.mrb[0].mxu0
    %v1114 = vadd.f32 %v1017, %v1113
    %v1115 = vpop.f32.mrb[0].mxu0
    %1116 = vmatprep.mubr.bf16.mxu0 %v443
    %1117 = vmatmul.mubr.bf16.gmra.mrb[0].mxu0 %v442
    %v1118 = vpop.f32.mrb[0].mxu0
    %v1119 = vadd.f32 %v1022, %v1118
    %v1120 = vpop.f32.mrb[0].mxu0
    %v1121 = vpop.f32.mrb[0].mxu0
    %v1122 = vadd.f32 %v1025, %v1121
    %v1123 = vpop.f32.mrb[0].mxu0
    %1124 = vmatprep.mubr.bf16.mxu0 %v450
    %1125 = vmatmul.mubr.bf16.gmra.mrb[0].mxu0 %v449
    %v1126 = vpop.f32.mrb[0].mxu0
    %v1127 = vadd.f32 %v1030, %v1126
    %v1128 = vpop.f32.mrb[0].mxu0
    %v1129 = vpop.f32.mrb[0].mxu0
    %v1130 = vadd.f32 %v1033, %v1129
    %v1131 = vpop.f32.mrb[0].mxu0
    %1132 = vmatprep.mubr.bf16.mxu0 %v457
    %1133 = vmatmul.mubr.bf16.gmra.mrb[0].mxu0 %v456
    %v1134 = vpop.f32.mrb[0].mxu0
    %v1135 = vadd.f32 %v1038, %v1134
    %v1136 = vpop.f32.mrb[0].mxu0
    %v1137 = vpop.f32.mrb[0].mxu0
    %v1138 = vadd.f32 %v1041, %v1137
    %v1139 = vpop.f32.mrb[0].mxu0
    %1140 = vmatprep.mubr.bf16.mxu0 %v464
    %1141 = vmatmul.mubr.bf16.gmra.mrb[0].mxu0 %v463
    %v1142 = vpop.f32.mrb[0].mxu0
    %v1143 = vadd.f32 %v1046, %v1142
    %v1144 = vpop.f32.mrb[0].mxu0
    %v1145 = vpop.f32.mrb[0].mxu0
    %v1146 = vadd.f32 %v1049, %v1145
    %v1147 = vpop.f32.mrb[0].mxu0
    %1148 = vdwg.mxu0
    %1149 = vmatprep.subr.bf16.mxu0 0
    %1150 = vmatpush1.bf16.msra.mxu0 %v794
    %1151 = vmatprep.subr.bf16.mxu0 0
    %1152 = vmatpush1.bf16.msra.mxu0 %v795
    %1153 = vmatprep.subr.bf16.mxu0 0
    %1154 = vmatpush1.bf16.msra.mxu0 %v796
    %1155 = vmatprep.subr.bf16.mxu0 0
    %1156 = vmatpush1.bf16.msra.mxu0 %v797
    %1157 = vmatprep.subr.bf16.mxu0 0
    %1158 = vmatpush1.bf16.msra.mxu0 %v798
    %1159 = vmatprep.subr.bf16.mxu0 0
    %1160 = vmatpush1.bf16.msra.mxu0 %v799
    %1161 = vmatprep.subr.bf16.mxu0 0
    %1162 = vmatpush1.bf16.msra.mxu0 %v800
    %1163 = vmatprep.subr.bf16.mxu0 0
    %1164 = vmatpush1.bf16.msra.mxu0 %v801
    %1165 = vmatprep.subr.bf16.mxu0 0
    %1166 = vmatpush1.bf16.msra.mxu0 0
    %1167 = vmatprep.subr.bf16.mxu0 0
    %1168 = vmatpush1.bf16.msra.mxu0 0
    %1169 = vmatprep.subr.bf16.mxu0 0
    %1170 = vmatpush1.bf16.msra.mxu0 0
    %1171 = vmatprep.subr.bf16.mxu0 0
    %1172 = vmatpush1.bf16.msra.mxu0 0
    %1173 = vmatprep.subr.bf16.mxu0 0
    %1174 = vmatpush1.bf16.msra.mxu0 0
    %1175 = vmatprep.subr.bf16.mxu0 0
    %1176 = vmatpush1.bf16.msra.mxu0 0
    %1177 = vmatprep.subr.bf16.mxu0 0
    %1178 = vmatpush1.bf16.msra.mxu0 0
    %1179 = vmatprep.subr.bf16.mxu0 0
    %1180 = vmatpush1.bf16.msra.mxu0 0
    %1181 = vmatprep.mubr.bf16.mxu0 0
    %1182 = vmatmul.mubr.bf16.gmra.mrb[0].mxu0 %v416
    %v1183 = vpop.f32.mrb[0].mxu0
    %v1184 = vadd.f32 %v1087, %v1183
    %v1185 = vpop.f32.mrb[0].mxu0
    %v1186 = vpop.f32.mrb[0].mxu0
    %v1187 = vadd.f32 %v1090, %v1186
    %v1188 = vpop.f32.mrb[0].mxu0
    %1189 = vmatprep.mubr.bf16.mxu0 0
    %1190 = vmatmul.mubr.bf16.gmra.mrb[0].mxu0 %v423
    %v1191 = vpop.f32.mrb[0].mxu0
    %v1192 = vadd.f32 %v1095, %v1191
    %v1193 = vpop.f32.mrb[0].mxu0
    %v1194 = vpop.f32.mrb[0].mxu0
    %v1195 = vadd.f32 %v1098, %v1194
    %v1196 = vpop.f32.mrb[0].mxu0
    %1197 = vmatprep.mubr.bf16.mxu0 0
    %1198 = vmatmul.mubr.bf16.gmra.mrb[0].mxu0 %v430
    %v1199 = vpop.f32.mrb[0].mxu0
    %v1200 = vadd.f32 %v1103, %v1199
    %v1201 = vpop.f32.mrb[0].mxu0
    %v1202 = vpop.f32.mrb[0].mxu0
    %v1203 = vadd.f32 %v1106, %v1202
    %v1204 = vpop.f32.mrb[0].mxu0
    %1205 = vmatprep.mubr.bf16.mxu0 0
    %1206 = vmatmul.mubr.bf16.gmra.mrb[0].mxu0 %v437
    %v1207 = vpop.f32.mrb[0].mxu0
    %v1208 = vadd.f32 %v1111, %v1207
    %v1209 = vpop.f32.mrb[0].mxu0
    %v1210 = vpop.f32.mrb[0].mxu0
    %v1211 = vadd.f32 %v1114, %v1210
    %v1212 = vpop.f32.mrb[0].mxu0
    %1213 = vmatprep.mubr.bf16.mxu0 0
    %1214 = vmatmul.mubr.bf16.gmra.mrb[0].mxu0 %v444
    %v1215 = vpop.f32.mrb[0].mxu0
    %v1216 = vadd.f32 %v1119, %v1215
    %v1217 = vpop.f32.mrb[0].mxu0
    %v1218 = vpop.f32.mrb[0].mxu0
    %v1219 = vadd.f32 %v1122, %v1218
    %v1220 = vpop.f32.mrb[0].mxu0
    %1221 = vmatprep.mubr.bf16.mxu0 0
    %1222 = vmatmul.mubr.bf16.gmra.mrb[0].mxu0 %v451
    %v1223 = vpop.f32.mrb[0].mxu0
    %v1224 = vadd.f32 %v1127, %v1223
    %v1225 = vpop.f32.mrb[0].mxu0
    %v1226 = vpop.f32.mrb[0].mxu0
    %v1227 = vadd.f32 %v1130, %v1226
    %v1228 = vpop.f32.mrb[0].mxu0
    %1229 = vmatprep.mubr.bf16.mxu0 0
    %1230 = vmatmul.mubr.bf16.gmra.mrb[0].mxu0 %v458
    %v1231 = vpop.f32.mrb[0].mxu0
    %v1232 = vadd.f32 %v1135, %v1231
    %v1233 = vpop.f32.mrb[0].mxu0
    %v1234 = vpop.f32.mrb[0].mxu0
    %v1235 = vadd.f32 %v1138, %v1234
    %v1236 = vpop.f32.mrb[0].mxu0
    %1237 = vmatprep.mubr.bf16.mxu0 0
    %1238 = vmatmul.mubr.bf16.gmra.mrb[0].mxu0 %v465
    %v1239 = vpop.f32.mrb[0].mxu0
    %v1240 = vadd.f32 %v1143, %v1239
    %v1241 = vpop.f32.mrb[0].mxu0
    %v1242 = vpop.f32.mrb[0].mxu0
    %v1243 = vadd.f32 %v1146, %v1242
    %v1244 = vpop.f32.mrb[0].mxu0
    %1245 = vdwg.mxu0
    %v1246 = vmax.f32 %v1184, 0.0
    %v1247 = vmax.f32 %v1187, 0.0
    %v1248 = vmax.f32 %v1192, 0.0
    %v1249 = vmax.f32 %v1195, 0.0
    %v1250 = vmax.f32 %v1200, 0.0
    %v1251 = vmax.f32 %v1203, 0.0
    %v1252 = vmax.f32 %v1208, 0.0
    %v1253 = vmax.f32 %v1211, 0.0
    %v1254 = vmax.f32 %v1216, 0.0
    %v1255 = vmax.f32 %v1219, 0.0
    %v1256 = vmax.f32 %v1224, 0.0
    %v1257 = vmax.f32 %v1227, 0.0
    %v1258 = vmax.f32 %v1232, 0.0
    %v1259 = vmax.f32 %v1235, 0.0
    %v1260 = vmax.f32 %v1240, 0.0
    %v1261 = vmax.f32 %v1243, 0.0
    %v1262 = vpack.c.bf16 %v1247, %v1246
    %v1263 = vpack.c.bf16 %v1249, %v1248
    %v1264 = vpack.c.bf16 %v1251, %v1250
    %v1265 = vpack.c.bf16 %v1253, %v1252
    %v1266 = vpack.c.bf16 %v1255, %v1254
    %v1267 = vpack.c.bf16 %v1257, %v1256
    %v1268 = vpack.c.bf16 %v1259, %v1258
    %v1269 = vpack.c.bf16 %v1261, %v1260
    %v1270 = vld [vmem:[%s3] sm:$0xf]
    %v1271 = vld [vmem:[%s3 + $0x4] sm:$0xf]
    %v1272 = vld [vmem:[%s3 + $0x8] sm:$0xf]
    %v1273 = vld [vmem:[%s3 + $0xc] sm:$0xf]
    %v1274 = vld [vmem:[%s3 + $0x10] sm:$0xf]
    %v1275 = vld [vmem:[%s3 + $0x14] sm:$0xf]
    %v1276 = vld [vmem:[%s3 + $0x18] sm:$0xf]
    %v1277 = vld [vmem:[%s3 + $0x1c] sm:$0xf]
    %v1278 = vld [vmem:[%s3 + $0x20] sm:$0xf]
    %v1279 = vld [vmem:[%s3 + $0x24] sm:$0xf]
    %v1280 = vld [vmem:[%s3 + $0x28] sm:$0xf]
    %v1281 = vld [vmem:[%s3 + $0x2c] sm:$0xf]
    %v1282 = vld [vmem:[%s3 + $0x30] sm:$0xf]
    %v1283 = vld [vmem:[%s3 + $0x34] sm:$0xf]
    %v1284 = vld [vmem:[%s3 + $0x38] sm:$0xf]
    %v1285 = vld [vmem:[%s3 + $0x3c] sm:$0xf]
    %v1286 = vld [vmem:[%s4] sm:$0x1]
    %v1288 = vlaneseq
    %v1289 = vshrl.u32 %v1288, 7
    %v1290 = vsub.s32 0, %v1289
    %v1291 = vrot.slane %v1286, %v1290
    %v1309 = vunpack.c.l.b16 %v1270
    %v1310 = vunpack.c.l.b16 %v1271
    %v1311 = vunpack.c.l.b16 %v1272
    %v1312 = vunpack.c.l.b16 %v1273
    %v1313 = vunpack.c.l.b16 %v1274
    %v1314 = vunpack.c.l.b16 %v1275
    %v1315 = vunpack.c.l.b16 %v1276
    %v1316 = vunpack.c.l.b16 %v1277
    %v1317 = vunpack.c.l.b16 %v1278
    %v1318 = vunpack.c.l.b16 %v1279
    %v1319 = vunpack.c.l.b16 %v1280
    %v1320 = vunpack.c.l.b16 %v1281
    %v1321 = vunpack.c.l.b16 %v1282
    %v1322 = vunpack.c.l.b16 %v1283
    %v1323 = vunpack.c.l.b16 %v1284
    %v1324 = vunpack.c.l.b16 %v1285
    %v1325 = vpack.c.b16 %v1310, %v1309
    %v1326 = vpack.c.b16 %v1312, %v1311
    %v1327 = vpack.c.b16 %v1314, %v1313
    %v1328 = vpack.c.b16 %v1316, %v1315
    %v1329 = vpack.c.b16 %v1318, %v1317
    %v1330 = vpack.c.b16 %v1320, %v1319
    %v1331 = vpack.c.b16 %v1322, %v1321
    %v1332 = vpack.c.b16 %v1324, %v1323
    %1341 = vmatprep.subr.bf16.mxu0 0
    %1342 = vmatpush1.bf16.msra.mxu0 %v1325
    %1343 = vmatprep.subr.bf16.mxu0 0
    %1344 = vmatpush1.bf16.msra.mxu0 %v1326
    %1345 = vmatprep.subr.bf16.mxu0 0
    %1346 = vmatpush1.bf16.msra.mxu0 %v1327
    %1347 = vmatprep.subr.bf16.mxu0 0
    %1348 = vmatpush1.bf16.msra.mxu0 %v1328
    %1349 = vmatprep.subr.bf16.mxu0 0
    %1350 = vmatpush1.bf16.msra.mxu0 %v1329
    %1351 = vmatprep.subr.bf16.mxu0 0
    %1352 = vmatpush1.bf16.msra.mxu0 %v1330
    %1353 = vmatprep.subr.bf16.mxu0 0
    %1354 = vmatpush1.bf16.msra.mxu0 %v1331
    %1355 = vmatprep.subr.bf16.mxu0 0
    %1356 = vmatpush1.bf16.msra.mxu0 %v1332
    %1357 = vmatprep.subr.bf16.mxu0 0
    %1358 = vmatpush1.bf16.msra.mxu0 0
    %1359 = vmatprep.subr.bf16.mxu0 0
    %1360 = vmatpush1.bf16.msra.mxu0 0
    %1361 = vmatprep.subr.bf16.mxu0 0
    %1362 = vmatpush1.bf16.msra.mxu0 0
    %1363 = vmatprep.subr.bf16.mxu0 0
    %1364 = vmatpush1.bf16.msra.mxu0 0
    %1365 = vmatprep.subr.bf16.mxu0 0
    %1366 = vmatpush1.bf16.msra.mxu0 0
    %1367 = vmatprep.subr.bf16.mxu0 0
    %1368 = vmatpush1.bf16.msra.mxu0 0
    %1369 = vmatprep.subr.bf16.mxu0 0
    %1370 = vmatpush1.bf16.msra.mxu0 0
    %1371 = vmatprep.subr.bf16.mxu0 0
    %1372 = vmatpush1.bf16.msra.mxu0 0
    %1373 = vmatprep.mubr.bf16.mxu0 0
    %1374 = vmatmul.mubr.bf16.gmra.mrb[0].mxu0 %v1262
    %v1375 = vpop.f32.mrb[0].mxu0
    %v1376 = vadd.f32 %v1291, %v1375
    %v1377 = vpop.f32.mrb[0].mxu0
    %v1378 = vpop.f32.mrb[0].mxu0
    %v1379 = vadd.f32 %v1291, %v1378
    %v1380 = vpop.f32.mrb[0].mxu0
    %1381 = vmatprep.mubr.bf16.mxu0 0
    %1382 = vmatmul.mubr.bf16.gmra.mrb[0].mxu0 %v1263
    %v1383 = vpop.f32.mrb[0].mxu0
    %v1384 = vadd.f32 %v1291, %v1383
    %v1385 = vpop.f32.mrb[0].mxu0
    %v1386 = vpop.f32.mrb[0].mxu0
    %v1387 = vadd.f32 %v1291, %v1386
    %v1388 = vpop.f32.mrb[0].mxu0
    %1389 = vmatprep.mubr.bf16.mxu0 0
    %1390 = vmatmul.mubr.bf16.gmra.mrb[0].mxu0 %v1264
    %v1391 = vpop.f32.mrb[0].mxu0
    %v1392 = vadd.f32 %v1291, %v1391
    %v1393 = vpop.f32.mrb[0].mxu0
    %v1394 = vpop.f32.mrb[0].mxu0
    %v1395 = vadd.f32 %v1291, %v1394
    %v1396 = vpop.f32.mrb[0].mxu0
    %1397 = vmatprep.mubr.bf16.mxu0 0
    %1398 = vmatmul.mubr.bf16.gmra.mrb[0].mxu0 %v1265
    %v1399 = vpop.f32.mrb[0].mxu0
    %v1400 = vadd.f32 %v1291, %v1399
    %v1401 = vpop.f32.mrb[0].mxu0
    %v1402 = vpop.f32.mrb[0].mxu0
    %v1403 = vadd.f32 %v1291, %v1402
    %v1404 = vpop.f32.mrb[0].mxu0
    %1405 = vmatprep.mubr.bf16.mxu0 0
    %1406 = vmatmul.mubr.bf16.gmra.mrb[0].mxu0 %v1266
    %v1407 = vpop.f32.mrb[0].mxu0
    %v1408 = vadd.f32 %v1291, %v1407
    %v1409 = vpop.f32.mrb[0].mxu0
    %v1410 = vpop.f32.mrb[0].mxu0
    %v1411 = vadd.f32 %v1291, %v1410
    %v1412 = vpop.f32.mrb[0].mxu0
    %1413 = vmatprep.mubr.bf16.mxu0 0
    %1414 = vmatmul.mubr.bf16.gmra.mrb[0].mxu0 %v1267
    %v1415 = vpop.f32.mrb[0].mxu0
    %v1416 = vadd.f32 %v1291, %v1415
    %v1417 = vpop.f32.mrb[0].mxu0
    %v1418 = vpop.f32.mrb[0].mxu0
    %v1419 = vadd.f32 %v1291, %v1418
    %v1420 = vpop.f32.mrb[0].mxu0
    %1421 = vmatprep.mubr.bf16.mxu0 0
    %1422 = vmatmul.mubr.bf16.gmra.mrb[0].mxu0 %v1268
    %v1423 = vpop.f32.mrb[0].mxu0
    %v1424 = vadd.f32 %v1291, %v1423
    %v1425 = vpop.f32.mrb[0].mxu0
    %v1426 = vpop.f32.mrb[0].mxu0
    %v1427 = vadd.f32 %v1291, %v1426
    %v1428 = vpop.f32.mrb[0].mxu0
    %1429 = vmatprep.mubr.bf16.mxu0 0
    %1430 = vmatmul.mubr.bf16.gmra.mrb[0].mxu0 %v1269
    %v1431 = vpop.f32.mrb[0].mxu0
    %v1432 = vadd.f32 %v1291, %v1431
    %v1433 = vpop.f32.mrb[0].mxu0
    %v1434 = vpop.f32.mrb[0].mxu0
    %v1435 = vadd.f32 %v1291, %v1434
    %v1436 = vpop.f32.mrb[0].mxu0
    %1437 = vdwg.mxu0
    %vm1438 = vcmask 261248
    %v1439 = vsel %vm1438, %v1376, -inf
    %1440 = vmax.xlane.f32.xlu0 %v1439
    %v1441 = vpop.xlane.xlu0 %1440
    %v1442 = vsel %vm1438, %v1379, -inf
    %1443 = vmax.xlane.f32.xlu0 %v1442
    %v1444 = vpop.xlane.xlu0 %1443
    %v1445 = vsel %vm1438, %v1384, -inf
    %1446 = vmax.xlane.f32.xlu0 %v1445
    %v1447 = vpop.xlane.xlu0 %1446
    %v1448 = vsel %vm1438, %v1387, -inf
    %1449 = vmax.xlane.f32.xlu0 %v1448
    %v1450 = vpop.xlane.xlu0 %1449
    %v1451 = vsel %vm1438, %v1392, -inf
    %1452 = vmax.xlane.f32.xlu0 %v1451
    %v1453 = vpop.xlane.xlu0 %1452
    %v1454 = vsel %vm1438, %v1395, -inf
    %1455 = vmax.xlane.f32.xlu0 %v1454
    %v1456 = vpop.xlane.xlu0 %1455
    %v1457 = vsel %vm1438, %v1400, -inf
    %1458 = vmax.xlane.f32.xlu0 %v1457
    %v1459 = vpop.xlane.xlu0 %1458
    %v1460 = vsel %vm1438, %v1403, -inf
    %1461 = vmax.xlane.f32.xlu0 %v1460
    %v1462 = vpop.xlane.xlu0 %1461
    %v1463 = vsel %vm1438, %v1408, -inf
    %1464 = vmax.xlane.f32.xlu0 %v1463
    %v1465 = vpop.xlane.xlu0 %1464
    %v1466 = vsel %vm1438, %v1411, -inf
    %1467 = vmax.xlane.f32.xlu0 %v1466
    %v1468 = vpop.xlane.xlu0 %1467
    %v1469 = vsel %vm1438, %v1416, -inf
    %1470 = vmax.xlane.f32.xlu0 %v1469
    %v1471 = vpop.xlane.xlu0 %1470
    %v1472 = vsel %vm1438, %v1419, -inf
    %1473 = vmax.xlane.f32.xlu0 %v1472
    %v1474 = vpop.xlane.xlu0 %1473
    %v1475 = vsel %vm1438, %v1424, -inf
    %1476 = vmax.xlane.f32.xlu0 %v1475
    %v1477 = vpop.xlane.xlu0 %1476
    %v1478 = vsel %vm1438, %v1427, -inf
    %1479 = vmax.xlane.f32.xlu0 %v1478
    %v1480 = vpop.xlane.xlu0 %1479
    %v1481 = vsel %vm1438, %v1432, -inf
    %1482 = vmax.xlane.f32.xlu0 %v1481
    %v1483 = vpop.xlane.xlu0 %1482
    %v1484 = vsel %vm1438, %v1435, -inf
    %1485 = vmax.xlane.f32.xlu0 %v1484
    %v1486 = vpop.xlane.xlu0 %1485
    %v1487 = vsub.f32 %v1376, %v1441
    %v1488 = vsub.f32 %v1379, %v1444
    %v1489 = vsub.f32 %v1384, %v1447
    %v1490 = vsub.f32 %v1387, %v1450
    %v1491 = vsub.f32 %v1392, %v1453
    %v1492 = vsub.f32 %v1395, %v1456
    %v1493 = vsub.f32 %v1400, %v1459
    %v1494 = vsub.f32 %v1403, %v1462
    %v1495 = vsub.f32 %v1408, %v1465
    %v1496 = vsub.f32 %v1411, %v1468
    %v1497 = vsub.f32 %v1416, %v1471
    %v1498 = vsub.f32 %v1419, %v1474
    %v1499 = vsub.f32 %v1424, %v1477
    %v1500 = vsub.f32 %v1427, %v1480
    %v1501 = vsub.f32 %v1432, %v1483
    %v1502 = vsub.f32 %v1435, %v1486
    %v1503 = vmul.f32 %v1487, 1.442695
    %v1504 = vpow.pop %v1503
    %v1505 = vmul.f32 %v1488, 1.442695
    %v1506 = vpow.pop %v1505
    %v1507 = vmul.f32 %v1489, 1.442695
    %v1508 = vpow.pop %v1507
    %v1509 = vmul.f32 %v1490, 1.442695
    %v1510 = vpow.pop %v1509
    %v1511 = vmul.f32 %v1491, 1.442695
    %v1512 = vpow.pop %v1511
    %v1513 = vmul.f32 %v1492, 1.442695
    %v1514 = vpow.pop %v1513
    %v1515 = vmul.f32 %v1493, 1.442695
    %v1516 = vpow.pop %v1515
    %v1517 = vmul.f32 %v1494, 1.442695
    %v1518 = vpow.pop %v1517
    %v1519 = vmul.f32 %v1495, 1.442695
    %v1520 = vpow.pop %v1519
    %v1521 = vmul.f32 %v1496, 1.442695
    %v1522 = vpow.pop %v1521
    %v1523 = vmul.f32 %v1497, 1.442695
    %v1524 = vpow.pop %v1523
    %v1525 = vmul.f32 %v1498, 1.442695
    %v1526 = vpow.pop %v1525
    %v1527 = vmul.f32 %v1499, 1.442695
    %v1528 = vpow.pop %v1527
    %v1529 = vmul.f32 %v1500, 1.442695
    %v1530 = vpow.pop %v1529
    %v1531 = vmul.f32 %v1501, 1.442695
    %v1532 = vpow.pop %v1531
    %v1533 = vmul.f32 %v1502, 1.442695
    %v1534 = vpow.pop %v1533
    %1551 = vrot.lane.b32.xlu0 %v1504, 112
    %v1552 = vpop.permute.xlu0 %1551
    %1553 = vrot.lane.b32.xlu0 %v1506, 112
    %v1554 = vpop.permute.xlu0 %1553
    %1555 = vrot.lane.b32.xlu0 %v1508, 112
    %v1556 = vpop.permute.xlu0 %1555
    %1557 = vrot.lane.b32.xlu0 %v1510, 112
    %v1558 = vpop.permute.xlu0 %1557
    %1559 = vrot.lane.b32.xlu0 %v1512, 112
    %v1560 = vpop.permute.xlu0 %1559
    %1561 = vrot.lane.b32.xlu0 %v1514, 112
    %v1562 = vpop.permute.xlu0 %1561
    %1563 = vrot.lane.b32.xlu0 %v1516, 112
    %v1564 = vpop.permute.xlu0 %1563
    %1565 = vrot.lane.b32.xlu0 %v1518, 112
    %v1566 = vpop.permute.xlu0 %1565
    %1567 = vrot.lane.b32.xlu0 %v1520, 112
    %v1568 = vpop.permute.xlu0 %1567
    %1569 = vrot.lane.b32.xlu0 %v1522, 112
    %v1570 = vpop.permute.xlu0 %1569
    %1571 = vrot.lane.b32.xlu0 %v1524, 112
    %v1572 = vpop.permute.xlu0 %1571
    %1573 = vrot.lane.b32.xlu0 %v1526, 112
    %v1574 = vpop.permute.xlu0 %1573
    %1575 = vrot.lane.b32.xlu0 %v1528, 112
    %v1576 = vpop.permute.xlu0 %1575
    %1577 = vrot.lane.b32.xlu0 %v1530, 112
    %v1578 = vpop.permute.xlu0 %1577
    %1579 = vrot.lane.b32.xlu0 %v1532, 112
    %v1580 = vpop.permute.xlu0 %1579
    %1581 = vrot.lane.b32.xlu0 %v1534, 112
    %v1582 = vpop.permute.xlu0 %1581
    %vm1599 = vcmask 130048
    %v1600 = vsel %vm1599, %v1552, 0.0
    %1601 = vadd.xlane.f32.xlu0 %v1600
    %v1602 = vpop.xlane.xlu0 %1601
    %v1603 = vsel %vm1599, %v1554, 0.0
    %1604 = vadd.xlane.f32.xlu0 %v1603
    %v1605 = vpop.xlane.xlu0 %1604
    %v1606 = vsel %vm1599, %v1556, 0.0
    %1607 = vadd.xlane.f32.xlu0 %v1606
    %v1608 = vpop.xlane.xlu0 %1607
    %v1609 = vsel %vm1599, %v1558, 0.0
    %1610 = vadd.xlane.f32.xlu0 %v1609
    %v1611 = vpop.xlane.xlu0 %1610
    %v1612 = vsel %vm1599, %v1560, 0.0
    %1613 = vadd.xlane.f32.xlu0 %v1612
    %v1614 = vpop.xlane.xlu0 %1613
    %v1615 = vsel %vm1599, %v1562, 0.0
    %1616 = vadd.xlane.f32.xlu0 %v1615
    %v1617 = vpop.xlane.xlu0 %1616
    %v1618 = vsel %vm1599, %v1564, 0.0
    %1619 = vadd.xlane.f32.xlu0 %v1618
    %v1620 = vpop.xlane.xlu0 %1619
    %v1621 = vsel %vm1599, %v1566, 0.0
    %1622 = vadd.xlane.f32.xlu0 %v1621
    %v1623 = vpop.xlane.xlu0 %1622
    %v1624 = vsel %vm1599, %v1568, 0.0
    %1625 = vadd.xlane.f32.xlu0 %v1624
    %v1626 = vpop.xlane.xlu0 %1625
    %v1627 = vsel %vm1599, %v1570, 0.0
    %1628 = vadd.xlane.f32.xlu0 %v1627
    %v1629 = vpop.xlane.xlu0 %1628
    %v1630 = vsel %vm1599, %v1572, 0.0
    %1631 = vadd.xlane.f32.xlu0 %v1630
    %v1632 = vpop.xlane.xlu0 %1631
    %v1633 = vsel %vm1599, %v1574, 0.0
    %1634 = vadd.xlane.f32.xlu0 %v1633
    %v1635 = vpop.xlane.xlu0 %1634
    %v1636 = vsel %vm1599, %v1576, 0.0
    %1637 = vadd.xlane.f32.xlu0 %v1636
    %v1638 = vpop.xlane.xlu0 %1637
    %v1639 = vsel %vm1599, %v1578, 0.0
    %1640 = vadd.xlane.f32.xlu0 %v1639
    %v1641 = vpop.xlane.xlu0 %1640
    %v1642 = vsel %vm1599, %v1580, 0.0
    %1643 = vadd.xlane.f32.xlu0 %v1642
    %v1644 = vpop.xlane.xlu0 %1643
    %v1645 = vsel %vm1599, %v1582, 0.0
    %1646 = vadd.xlane.f32.xlu0 %v1645
    %v1647 = vpop.xlane.xlu0 %1646
    %v1648 = vrcp.pop %v1602
    %v1649 = vrcp.pop %v1605
    %v1650 = vrcp.pop %v1608
    %v1651 = vrcp.pop %v1611
    %v1652 = vrcp.pop %v1614
    %v1653 = vrcp.pop %v1617
    %v1654 = vrcp.pop %v1620
    %v1655 = vrcp.pop %v1623
    %v1656 = vrcp.pop %v1626
    %v1657 = vrcp.pop %v1629
    %v1658 = vrcp.pop %v1632
    %v1659 = vrcp.pop %v1635
    %v1660 = vrcp.pop %v1638
    %v1661 = vrcp.pop %v1641
    %v1662 = vrcp.pop %v1644
    %v1663 = vrcp.pop %v1647
    %v1664 = vmul.f32 %v1504, %v1648
    %v1665 = vmul.f32 %v1506, %v1649
    %v1666 = vmul.f32 %v1508, %v1650
    %v1667 = vmul.f32 %v1510, %v1651
    %v1668 = vmul.f32 %v1512, %v1652
    %v1669 = vmul.f32 %v1514, %v1653
    %v1670 = vmul.f32 %v1516, %v1654
    %v1671 = vmul.f32 %v1518, %v1655
    %v1672 = vmul.f32 %v1520, %v1656
    %v1673 = vmul.f32 %v1522, %v1657
    %v1674 = vmul.f32 %v1524, %v1658
    %v1675 = vmul.f32 %v1526, %v1659
    %v1676 = vmul.f32 %v1528, %v1660
    %v1677 = vmul.f32 %v1530, %v1661
    %v1678 = vmul.f32 %v1532, %v1662
    %v1679 = vmul.f32 %v1534, %v1663
    %v1680 = vmul.f32 %v1664, 16.0
    %v1681 = vmul.f32 %v1665, 16.0
    %v1682 = vmul.f32 %v1666, 16.0
    %v1683 = vmul.f32 %v1667, 16.0
    %v1684 = vmul.f32 %v1668, 16.0
    %v1685 = vmul.f32 %v1669, 16.0
    %v1686 = vmul.f32 %v1670, 16.0
    %v1687 = vmul.f32 %v1671, 16.0
    %v1688 = vmul.f32 %v1672, 16.0
    %v1689 = vmul.f32 %v1673, 16.0
    %v1690 = vmul.f32 %v1674, 16.0
    %v1691 = vmul.f32 %v1675, 16.0
    %v1692 = vmul.f32 %v1676, 16.0
    %v1693 = vmul.f32 %v1677, 16.0
    %v1694 = vmul.f32 %v1678, 16.0
    %v1695 = vmul.f32 %v1679, 16.0
    %v1696 = vadd.f32 %v1680, 1e-06
    %v1697 = vadd.f32 %v1681, 1e-06
    %v1698 = vadd.f32 %v1682, 1e-06
    %v1699 = vadd.f32 %v1683, 1e-06
    %v1700 = vadd.f32 %v1684, 1e-06
    %v1701 = vadd.f32 %v1685, 1e-06
    %v1702 = vadd.f32 %v1686, 1e-06
    %v1703 = vadd.f32 %v1687, 1e-06
    %v1704 = vadd.f32 %v1688, 1e-06
    %v1705 = vadd.f32 %v1689, 1e-06
    %v1706 = vadd.f32 %v1690, 1e-06
    %v1707 = vadd.f32 %v1691, 1e-06
    %v1708 = vadd.f32 %v1692, 1e-06
    %v1709 = vadd.f32 %v1693, 1e-06
    %v1710 = vadd.f32 %v1694, 1e-06
    %v1711 = vadd.f32 %v1695, 1e-06
    %1712 = vst.msk [vmem:[%s5] sm:$0xff] %vm1599, %v1376
    %1713 = vst.msk [vmem:[%s5 + $0x8] sm:$0xff] %vm1599, %v1379
    %1714 = vst.msk [vmem:[%s5 + $0x10] sm:$0xff] %vm1599, %v1384
    %1715 = vst.msk [vmem:[%s5 + $0x18] sm:$0xff] %vm1599, %v1387
    %1716 = vst.msk [vmem:[%s5 + $0x20] sm:$0xff] %vm1599, %v1392
    %1717 = vst.msk [vmem:[%s5 + $0x28] sm:$0xff] %vm1599, %v1395
    %1718 = vst.msk [vmem:[%s5 + $0x30] sm:$0xff] %vm1599, %v1400
    %1719 = vst.msk [vmem:[%s5 + $0x38] sm:$0xff] %vm1599, %v1403
    %1720 = vst.msk [vmem:[%s5 + $0x40] sm:$0xff] %vm1599, %v1408
    %1721 = vst.msk [vmem:[%s5 + $0x48] sm:$0xff] %vm1599, %v1411
    %1722 = vst.msk [vmem:[%s5 + $0x50] sm:$0xff] %vm1599, %v1416
    %1723 = vst.msk [vmem:[%s5 + $0x58] sm:$0xff] %vm1599, %v1419
    %1724 = vst.msk [vmem:[%s5 + $0x60] sm:$0xff] %vm1599, %v1424
    %1725 = vst.msk [vmem:[%s5 + $0x68] sm:$0xff] %vm1599, %v1427
    %1726 = vst.msk [vmem:[%s5 + $0x70] sm:$0xff] %vm1599, %v1432
    %1727 = vst.msk [vmem:[%s5 + $0x78] sm:$0xff] %vm1599, %v1435
    %1744 = vrot.lane.b32.xlu0 %v1696, 112
    %v1745 = vpop.permute.xlu0 %1744
    %1746 = vrot.lane.b32.xlu0 %v1697, 112
    %v1747 = vpop.permute.xlu0 %1746
    %1748 = vrot.lane.b32.xlu0 %v1698, 112
    %v1749 = vpop.permute.xlu0 %1748
    %1750 = vrot.lane.b32.xlu0 %v1699, 112
    %v1751 = vpop.permute.xlu0 %1750
    %1752 = vrot.lane.b32.xlu0 %v1700, 112
    %v1753 = vpop.permute.xlu0 %1752
    %1754 = vrot.lane.b32.xlu0 %v1701, 112
    %v1755 = vpop.permute.xlu0 %1754
    %1756 = vrot.lane.b32.xlu0 %v1702, 112
    %v1757 = vpop.permute.xlu0 %1756
    %1758 = vrot.lane.b32.xlu0 %v1703, 112
    %v1759 = vpop.permute.xlu0 %1758
    %1760 = vrot.lane.b32.xlu0 %v1704, 112
    %v1761 = vpop.permute.xlu0 %1760
    %1762 = vrot.lane.b32.xlu0 %v1705, 112
    %v1763 = vpop.permute.xlu0 %1762
    %1764 = vrot.lane.b32.xlu0 %v1706, 112
    %v1765 = vpop.permute.xlu0 %1764
    %1766 = vrot.lane.b32.xlu0 %v1707, 112
    %v1767 = vpop.permute.xlu0 %1766
    %1768 = vrot.lane.b32.xlu0 %v1708, 112
    %v1769 = vpop.permute.xlu0 %1768
    %1770 = vrot.lane.b32.xlu0 %v1709, 112
    %v1771 = vpop.permute.xlu0 %1770
    %1772 = vrot.lane.b32.xlu0 %v1710, 112
    %v1773 = vpop.permute.xlu0 %1772
    %1774 = vrot.lane.b32.xlu0 %v1711, 112
    %v1775 = vpop.permute.xlu0 %1774
    %1792 = vst.msk [vmem:[%s6] sm:$0xff] %vm1599, %v1745
    %1793 = vst.msk [vmem:[%s6 + $0x8] sm:$0xff] %vm1599, %v1747
    %1794 = vst.msk [vmem:[%s6 + $0x10] sm:$0xff] %vm1599, %v1749
    %1795 = vst.msk [vmem:[%s6 + $0x18] sm:$0xff] %vm1599, %v1751
    %1796 = vst.msk [vmem:[%s6 + $0x20] sm:$0xff] %vm1599, %v1753
    %1797 = vst.msk [vmem:[%s6 + $0x28] sm:$0xff] %vm1599, %v1755
    %1798 = vst.msk [vmem:[%s6 + $0x30] sm:$0xff] %vm1599, %v1757
    %1799 = vst.msk [vmem:[%s6 + $0x38] sm:$0xff] %vm1599, %v1759
    %1800 = vst.msk [vmem:[%s6 + $0x40] sm:$0xff] %vm1599, %v1761
    %1801 = vst.msk [vmem:[%s6 + $0x48] sm:$0xff] %vm1599, %v1763
    %1802 = vst.msk [vmem:[%s6 + $0x50] sm:$0xff] %vm1599, %v1765
    %1803 = vst.msk [vmem:[%s6 + $0x58] sm:$0xff] %vm1599, %v1767
    %1804 = vst.msk [vmem:[%s6 + $0x60] sm:$0xff] %vm1599, %v1769
    %1805 = vst.msk [vmem:[%s6 + $0x68] sm:$0xff] %vm1599, %v1771
    %1806 = vst.msk [vmem:[%s6 + $0x70] sm:$0xff] %vm1599, %v1773
    %1807 = vst.msk [vmem:[%s6 + $0x78] sm:$0xff] %vm1599, %v1775
    // Predicated region
    $region30: #{tpu_custom_call.1} parent=1 // pred_check
      _
    $region31: #{tpu_custom_call.1} parent=1 // pred_check_branch
      %1809 = sbr.rel (0) target = $region33
    $region32: #{tpu_custom_call.1} parent=1 // pred_region
      _
    $region33: #{tpu_custom_call.1} parent=1 // pred_fallthru
      _
    // Predicated region
    $region34: #{tpu_custom_call.1} parent=1 // pred_check
      _
    $region35: #{tpu_custom_call.1} parent=1 // pred_check_branch
      %1811 = sbr.rel (0) target = $region37
    $region36: #{tpu_custom_call.1} parent=1 // pred_region
      _
    $region37: #{tpu_custom_call.1} parent=1 // pred_fallthru
      _
    // Predicated region
    $region38: #{tpu_custom_call.1} parent=1 // pred_check
      _
    $region39: #{tpu_custom_call.1} parent=1 // pred_check_branch
      %1813 = sbr.rel (0) target = $region41
    $region40: #{tpu_custom_call.1} parent=1 // pred_region
      _
    $region41: #{tpu_custom_call.1} parent=1 // pred_fallthru
      _
    // Predicated region
    $region42: #{tpu_custom_call.1} parent=1 // pred_check
      _
    $region43: #{tpu_custom_call.1} parent=1 // pred_check_branch
      %1815 = sbr.rel (0) target = $region45
    $region44: #{tpu_custom_call.1} parent=1 // pred_region
      _
    $region45: #{tpu_custom_call.1} parent=1 // pred_fallthru
      _
    %1816 = vsyncpa [#allocation3], 1
    %1817 = vsyncpa [#allocation5], 1

</llo_original>
